<compile_context>
chip_gen: v7x
topology: tpu7x:2x2x1
jax: 0.10.0
libtpu: 0.0.40
codegen_flags: <defaults>
</compile_context>

<pallas_src>
import math
import jax
import jax.numpy as jnp
from jax import lax
from jax.experimental import pallas as pl
from jax.experimental.pallas import tpu as pltpu

LN_EPS = 1e-5  # nn.LayerNorm default


def _round_up(x, m):
    return ((x + m - 1) // m) * m


def _head_kernel(x_ref, w1_ref, b1_ref, w2_ref, b2_ref, o_ref):
    """Fused projection1 -> LayerNorm (gamma/beta pre-folded) -> projection2."""
    # projection1: (tm, H) @ (H, MID) on the MXU, f32 accumulation (x is bf16).
    h = jnp.dot(x_ref[...], w1_ref[...], preferred_element_type=jnp.float32)
    h = h + b1_ref[...]                                   # (tm, MID) f32

    # LayerNorm stats in a single pass over h: both XLU row-reductions share
    # one sweep; rsqrt goes to the EUP (free slot).
    mean = jnp.mean(h, axis=-1, keepdims=True)
    msq = jnp.mean(h * h, axis=-1, keepdims=True)
    var = msq - mean * mean
    r = lax.rsqrt(var + LN_EPS)                           # (tm, 1) f32
    cen = h - mean                                        # (tm, MID) f32

    # projection2: (tm, MID) @ (MID, D) on the MXU, f32 accumulation.
    # The per-row scalar r is applied to the narrow (tm, D) result instead of
    # the wide (tm, MID) input (mathematically identical), removing a
    # (tm, MID) f32 VPU multiply and a live (tm, MID) intermediate.
    out = jnp.dot(cen.astype(w2_ref.dtype), w2_ref[...],
                  preferred_element_type=jnp.float32)
    out = out * r + b2_ref[...]                           # (tm, D) f32
    o_ref[...] = out.astype(o_ref.dtype)


def _build_call(tm_eff, H, MID, D, M_pad, out_dtype, single_buffer_consts,
                flops, bytes_accessed):
    if single_buffer_consts:
        def const_spec(shape):
            return pl.BlockSpec(shape, lambda i: (0, 0),
                                pipeline_mode=pl.Buffered(1))
    else:
        def const_spec(shape):
            return pl.BlockSpec(shape, lambda i: (0, 0))

    return pl.pallas_call(
        _head_kernel,
        out_shape=jax.ShapeDtypeStruct((M_pad, D), out_dtype),
        grid_spec=pl.GridSpec(
            grid=(M_pad // tm_eff,),
            in_specs=[
                pl.BlockSpec((tm_eff, H), lambda i: (i, 0)),  # x row tile
                const_spec((H, MID)),                          # W1^T (constant)
                const_spec((1, MID)),                          # b1
                const_spec((MID, D)),                          # gamma-folded W2^T
                const_spec((1, D)),                            # folded output bias
            ],
            out_specs=pl.BlockSpec((tm_eff, D), lambda i: (i, 0)),
        ),
        compiler_params=pltpu.CompilerParams(
            dimension_semantics=("parallel",)),
        cost_estimate=pl.CostEstimate(
            flops=flops, transcendentals=M_pad,
            bytes_accessed=bytes_accessed),
    )


def text_embed_head(hidden_states, w1, b1, gamma, beta, w2, b2, *,
                    tm=1024, compute_dtype=jnp.bfloat16, out_dtype=None):
    """hidden_states: (B, Nt, H) -> (B, Nt, D). Weights in PyTorch convention:
       w1: (MID, H), b1: (MID,), gamma/beta: (MID,), w2: (D, MID), b2: (D,).
       Set out_dtype=jnp.bfloat16 if the downstream consumer accepts bf16
       (halves the output write stream)."""
    B, Nt, H = hidden_states.shape
    MID = w1.shape[0]
    D = w2.shape[0]
    M = B * Nt
    out_dtype = hidden_states.dtype if out_dtype is None else out_dtype

    # Tile selection:
    #  * large tm (multiple of 128) amortizes per-grid-step overhead;
    #  * cap so the single "parallel" row axis has >= 2 steps when M allows it
    #    (v7x has 2 TensorCores and this axis is the only thing sharding them).
    tm_eff = min(tm, _round_up(M, 8))
    if M > 8 and (M + tm_eff - 1) // tm_eff < 2:
        tm_eff = max(8, _round_up((M + 1) // 2, 8))
    if tm_eff >= 128:
        tm_eff = (tm_eff // 128) * 128          # keep the tile MXU-shaped
    M_pad = _round_up(M, tm_eff)

    # Stream x as bf16: the cast is fused with the reshape/pad, and the kernel
    # feeds bf16 to the MXU anyway, so this halves the dominant x DMA.
    x2d = hidden_states.reshape(M, H).astype(compute_dtype)
    if M_pad != M:
        # Padded rows are all-zero: h = b1 there, var(b1) > 0, so the LN
        # epilogue stays finite; the rows are sliced off below.
        x2d = jnp.pad(x2d, ((0, M_pad - M), (0, 0)))

    f32 = jnp.float32
    # Pre-transpose weights and fold the LayerNorm affine into projection2:
    #   proj2(gamma * xn + beta) = xn @ (gamma[:,None] * W2^T) + (beta @ W2^T + b2)
    w1_t = jnp.asarray(w1, f32).T.astype(compute_dtype)            # (H, MID)
    b1_r = jnp.asarray(b1, f32).reshape(1, MID)                    # (1, MID) f32
    w2_t = jnp.asarray(w2, f32).T                                  # (MID, D) f32
    g = jnp.asarray(gamma, f32)
    be = jnp.asarray(beta, f32)
    w2_fold = (g[:, None] * w2_t).astype(compute_dtype)            # (MID, D)
    b2_fold = (be @ w2_t + jnp.asarray(b2, f32)).reshape(1, D)     # (1, D) f32

    itemsize = jnp.dtype(compute_dtype).itemsize
    flops = 2 * M_pad * (H * MID + MID * D)
    bytes_accessed = (M_pad * H * itemsize
                      + w1_t.size * itemsize + w2_fold.size * itemsize
                      + (b1_r.size + b2_fold.size) * 4
                      + M_pad * D * jnp.dtype(out_dtype).itemsize)

    args = (x2d, w1_t, b1_r, w2_fold, b2_fold)
    try:
        out2d = _build_call(tm_eff, H, MID, D, M_pad, out_dtype, True,
                            flops, bytes_accessed)(*args)
    except Exception:
        # pipeline_mode=pl.Buffered(1) unsupported on this jax version; fall
        # back to default double-buffered constant operands (same semantics).
        out2d = _build_call(tm_eff, H, MID, D, M_pad, out_dtype, False,
                            flops, bytes_accessed)(*args)

    return out2d[:M].reshape(B, Nt, D)


def reference_head(hidden_states, w1, b1, gamma, beta, w2, b2,
                   compute_dtype=jnp.float32):
    """Pure-JAX reference of the PyTorch head. With compute_dtype=bfloat16 it
    mimics the kernel's matmul numerics (bf16 operands, f32 accumulation)."""
    f32 = jnp.float32
    x = hidden_states.astype(compute_dtype)
    h = jnp.dot(x, jnp.asarray(w1, f32).T.astype(compute_dtype),
                preferred_element_type=f32) + jnp.asarray(b1, f32)
    mean = jnp.mean(h, axis=-1, keepdims=True)
    var = jnp.mean((h - mean) ** 2, axis=-1, keepdims=True)
    hn = (h - mean) * lax.rsqrt(var + LN_EPS) * jnp.asarray(gamma, f32) \
        + jnp.asarray(beta, f32)
    out = jnp.dot(hn.astype(compute_dtype),
                  jnp.asarray(w2, f32).T.astype(compute_dtype),
                  preferred_element_type=f32) + jnp.asarray(b2, f32)
    return out.astype(hidden_states.dtype)


if __name__ == "__main__":
    # Small synthetic shapes consistent with the module's forward:
    #   B=2 texts, Nt=8 tokens, encoder hidden H=32 (stand-in for ModernBERT's
    #   768), mid=512 (fixed by the module), embedding_dim D=128.
    B, Nt, H = 2, 8, 32
    MID, D = 512, 128

    key = jax.random.PRNGKey(0)
    k_x, k_w1, k_b1, k_g, k_be, k_w2, k_b2 = jax.random.split(key, 7)

    hidden_states = jax.random.normal(k_x, (B, Nt, H), dtype=jnp.float32)

    # Deterministic parameter init (Kaiming-uniform-like bounds as in nn.Linear).
    bound1 = 1.0 / math.sqrt(H)
    w1 = jax.random.uniform(k_w1, (MID, H), minval=-bound1, maxval=bound1,
                            dtype=jnp.float32)
    b1 = jax.random.uniform(k_b1, (MID,), minval=-bound1, maxval=bound1,
                            dtype=jnp.float32)
    # Non-trivial gamma/beta to exercise the gamma/beta -> W2/bias fold.
    gamma = jax.random.uniform(k_g, (MID,), minval=0.5, maxval=1.5,
                               dtype=jnp.float32)
    beta = 0.1 * jax.random.normal(k_be, (MID,), dtype=jnp.float32)
    bound2 = 1.0 / math.sqrt(MID)
    w2 = jax.random.uniform(k_w2, (D, MID), minval=-bound2, maxval=bound2,
                            dtype=jnp.float32)
    b2 = jax.random.uniform(k_b2, (D,), minval=-bound2, maxval=bound2,
                            dtype=jnp.float32)

    text_feats = text_embed_head(hidden_states, w1, b1, gamma, beta, w2, b2)
    attention_mask = jnp.ones((B, Nt), dtype=jnp.int32)  # no padding in synthetic batch

    jax.block_until_ready(text_feats)
    jax.block_until_ready(attention_mask)

    assert text_feats.shape == (B, Nt, D)
    assert attention_mask.shape == (B, Nt)

    # Check against a reference with matching matmul numerics (bf16 operands,
    # f32 accumulation); fold/rounding placement differs only at bf16 level.
    ref_bf16 = reference_head(hidden_states, w1, b1, gamma, beta, w2, b2,
                              compute_dtype=jnp.bfloat16)
    assert jnp.allclose(text_feats, ref_bf16, atol=1e-2, rtol=1e-2), (
        "max|diff| vs bf16-numerics ref = "
        f"{float(jnp.max(jnp.abs(text_feats - ref_bf16)))}")

    # Loose check against the pure-f32 reference (bf16 operands => ~0.5% rel err).
    ref_f32 = reference_head(hidden_states, w1, b1, gamma, beta, w2, b2,
                             compute_dtype=jnp.float32)
    assert jnp.allclose(text_feats, ref_f32, atol=5e-2, rtol=5e-2), (
        "max|diff| vs f32 ref = "
        f"{float(jnp.max(jnp.abs(text_feats - ref_f32)))}")

    print("KERNEL_OK")
</pallas_src>

<mosaic_0001>
module attributes {stable_mosaic.version = 11 : i64} {
  func.func @_head_kernel(%arg0: i32, %arg1: memref<8x32xbf16, #tpu.memory_space<vmem>>, %arg2: memref<32x512xbf16, #tpu.memory_space<vmem>>, %arg3: memref<1x512xf32, #tpu.memory_space<vmem>>, %arg4: memref<512x128xbf16, #tpu.memory_space<vmem>>, %arg5: memref<1x128xf32, #tpu.memory_space<vmem>>, %arg6: memref<8x128xf32, #tpu.memory_space<vmem>>) attributes {dimension_semantics = [#tpu.dimension_semantics<parallel>], iteration_bounds = array<i64: 2>, scalar_prefetch = 0 : i64, scratch_operands = 0 : i64, tpu.core_type = #tpu.core_type<tc>, window_params = [{transform_indices = @transform_0, window_bounds = array<i64: 8, 32>}, {pipeline_mode = #tpu.pipeline_mode<synchronous>, transform_indices = @transform_1, window_bounds = array<i64: 32, 512>}, {pipeline_mode = #tpu.pipeline_mode<synchronous>, transform_indices = @transform_2, window_bounds = array<i64: 1, 512>}, {pipeline_mode = #tpu.pipeline_mode<synchronous>, transform_indices = @transform_3, window_bounds = array<i64: 512, 128>}, {pipeline_mode = #tpu.pipeline_mode<synchronous>, transform_indices = @transform_4, window_bounds = array<i64: 1, 128>}, {transform_indices = @transform_5, window_bounds = array<i64: 8, 128>}]} {
    %c0 = arith.constant 0 : index
    %c0_0 = arith.constant 0 : index
    %0 = vector.load %arg1[%c0, %c0_0] : memref<8x32xbf16, #tpu.memory_space<vmem>>, vector<8x32xbf16>
    %c0_1 = arith.constant 0 : index
    %c0_2 = arith.constant 0 : index
    %1 = vector.load %arg2[%c0_1, %c0_2] : memref<32x512xbf16, #tpu.memory_space<vmem>>, vector<32x512xbf16>
    %cst = arith.constant dense<0.000000e+00> : vector<8x512xf32>
    %2 = tpu.matmul %0, %1, %cst {dimension_numbers = #tpu.dot_dimension_numbers<[1], [0], [0], [1], [0, 0, 1, 1], [], []>} : vector<8x32xbf16>, vector<32x512xbf16>, vector<8x512xf32> -> vector<8x512xf32>
    %c0_3 = arith.constant 0 : index
    %c0_4 = arith.constant 0 : index
    %3 = vector.load %arg3[%c0_3, %c0_4] : memref<1x512xf32, #tpu.memory_space<vmem>>, vector<1x512xf32>
    %4 = vector.broadcast %3 : vector<1x512xf32> to vector<8x512xf32>
    %5 = arith.addf %2, %4 : vector<8x512xf32>
    %cst_5 = arith.constant dense<0.000000e+00> : vector<8xf32>
    %6 = vector.multi_reduction <add>, %5, %cst_5 [1] : vector<8x512xf32> to vector<8xf32>
    %7 = vector.shape_cast %6 : vector<8xf32> to vector<8x1xf32>
    %cst_6 = arith.constant 5.120000e+02 : f32
    %8 = vector.broadcast %cst_6 : f32 to vector<8x1xf32>
    %9 = arith.divf %7, %8 : vector<8x1xf32>
    %10 = arith.mulf %5, %5 : vector<8x512xf32>
    %cst_7 = arith.constant dense<0.000000e+00> : vector<8xf32>
    %11 = vector.multi_reduction <add>, %10, %cst_7 [1] : vector<8x512xf32> to vector<8xf32>
    %12 = vector.shape_cast %11 : vector<8xf32> to vector<8x1xf32>
    %cst_8 = arith.constant 5.120000e+02 : f32
    %13 = vector.broadcast %cst_8 : f32 to vector<8x1xf32>
    %14 = arith.divf %12, %13 : vector<8x1xf32>
    %15 = arith.mulf %9, %9 : vector<8x1xf32>
    %16 = arith.subf %14, %15 : vector<8x1xf32>
    %cst_9 = arith.constant 9.99999974E-6 : f32
    %17 = vector.broadcast %cst_9 : f32 to vector<8x1xf32>
    %18 = arith.addf %16, %17 : vector<8x1xf32>
    %19 = math.rsqrt %18 : vector<8x1xf32>
    %20 = vector.broadcast %9 : vector<8x1xf32> to vector<8x512xf32>
    %21 = arith.subf %5, %20 : vector<8x512xf32>
    %22 = arith.truncf %21 : vector<8x512xf32> to vector<8x512xbf16>
    %c0_10 = arith.constant 0 : index
    %c0_11 = arith.constant 0 : index
    %23 = vector.load %arg4[%c0_10, %c0_11] : memref<512x128xbf16, #tpu.memory_space<vmem>>, vector<512x128xbf16>
    %cst_12 = arith.constant dense<0.000000e+00> : vector<8x128xf32>
    %24 = tpu.matmul %22, %23, %cst_12 {dimension_numbers = #tpu.dot_dimension_numbers<[1], [0], [0], [1], [0, 0, 1, 1], [], []>} : vector<8x512xbf16>, vector<512x128xbf16>, vector<8x128xf32> -> vector<8x128xf32>
    %25 = vector.broadcast %19 : vector<8x1xf32> to vector<8x128xf32>
    %26 = arith.mulf %24, %25 : vector<8x128xf32>
    %c0_13 = arith.constant 0 : index
    %c0_14 = arith.constant 0 : index
    %27 = vector.load %arg5[%c0_13, %c0_14] : memref<1x128xf32, #tpu.memory_space<vmem>>, vector<1x128xf32>
    %28 = vector.broadcast %27 : vector<1x128xf32> to vector<8x128xf32>
    %29 = arith.addf %26, %28 : vector<8x128xf32>
    %c0_15 = arith.constant 0 : index
    %c0_16 = arith.constant 0 : index
    %30 = vector.load %arg6[%c0_15, %c0_16] : memref<8x128xf32, #tpu.memory_space<vmem>>, vector<8x128xf32>
    tpu.vector_store %arg6[%c0_15, %c0_16], %29 {strides = array<i32>} : memref<8x128xf32, #tpu.memory_space<vmem>>, vector<8x128xf32>,
    return
  }
  func.func @transform_0(%arg0: i32) -> (i32, i32) {
    %c0_i32 = arith.constant 0 : i32
    %c0_i32_0 = arith.constant 0 : i32
    return %arg0, %c0_i32 : i32, i32
  }
  func.func @transform_1(%arg0: i32) -> (i32, i32) {
    %c0_i32 = arith.constant 0 : i32
    %c0_i32_0 = arith.constant 0 : i32
    %c0_i32_1 = arith.constant 0 : i32
    return %c0_i32, %c0_i32_0 : i32, i32
  }
  func.func @transform_2(%arg0: i32) -> (i32, i32) {
    %c0_i32 = arith.constant 0 : i32
    %c0_i32_0 = arith.constant 0 : i32
    %c0_i32_1 = arith.constant 0 : i32
    return %c0_i32, %c0_i32_0 : i32, i32
  }
  func.func @transform_3(%arg0: i32) -> (i32, i32) {
    %c0_i32 = arith.constant 0 : i32
    %c0_i32_0 = arith.constant 0 : i32
    %c0_i32_1 = arith.constant 0 : i32
    return %c0_i32, %c0_i32_0 : i32, i32
  }
  func.func @transform_4(%arg0: i32) -> (i32, i32) {
    %c0_i32 = arith.constant 0 : i32
    %c0_i32_0 = arith.constant 0 : i32
    %c0_i32_1 = arith.constant 0 : i32
    return %c0_i32, %c0_i32_0 : i32, i32
  }
  func.func @transform_5(%arg0: i32) -> (i32, i32) {
    %c0_i32 = arith.constant 0 : i32
    %c0_i32_0 = arith.constant 0 : i32
    return %arg0, %c0_i32 : i32, i32
  }
}

module attributes {stable_mosaic.version = 11 : i64} {
  func.func @_head_kernel(%arg0: i32, %arg1: memref<8x32xbf16, #tpu.memory_space<vmem>>, %arg2: memref<32x512xbf16, #tpu.memory_space<vmem>>, %arg3: memref<1x512xf32, #tpu.memory_space<vmem>>, %arg4: memref<512x128xbf16, #tpu.memory_space<vmem>>, %arg5: memref<1x128xf32, #tpu.memory_space<vmem>>, %arg6: memref<8x128xf32, #tpu.memory_space<vmem>>) attributes {dimension_semantics = [#tpu.dimension_semantics<parallel>], iteration_bounds = array<i64: 2>, scalar_prefetch = 0 : i64, scratch_operands = 0 : i64, tpu.core_type = #tpu.core_type<tc>, window_params = [{transform_indices = @transform_0, window_bounds = array<i64: 8, 32>}, {pipeline_mode = #tpu.pipeline_mode<synchronous>, transform_indices = @transform_1, window_bounds = array<i64: 32, 512>}, {pipeline_mode = #tpu.pipeline_mode<synchronous>, transform_indices = @transform_2, window_bounds = array<i64: 1, 512>}, {pipeline_mode = #tpu.pipeline_mode<synchronous>, transform_indices = @transform_3, window_bounds = array<i64: 512, 128>}, {pipeline_mode = #tpu.pipeline_mode<synchronous>, transform_indices = @transform_4, window_bounds = array<i64: 1, 128>}, {transform_indices = @transform_5, window_bounds = array<i64: 8, 128>}]} {
    %c0 = arith.constant 0 : index
    %c0_0 = arith.constant 0 : index
    %0 = vector.load %arg1[%c0, %c0_0] : memref<8x32xbf16, #tpu.memory_space<vmem>>, vector<8x32xbf16>
    %c0_1 = arith.constant 0 : index
    %c0_2 = arith.constant 0 : index
    %1 = vector.load %arg2[%c0_1, %c0_2] : memref<32x512xbf16, #tpu.memory_space<vmem>>, vector<32x512xbf16>
    %cst = arith.constant dense<0.000000e+00> : vector<8x512xf32>
    %2 = tpu.matmul %0, %1, %cst {dimension_numbers = #tpu.dot_dimension_numbers<[1], [0], [0], [1], [0, 0, 1, 1], [], []>} : vector<8x32xbf16>, vector<32x512xbf16>, vector<8x512xf32> -> vector<8x512xf32>
    %c0_3 = arith.constant 0 : index
    %c0_4 = arith.constant 0 : index
    %3 = vector.load %arg3[%c0_3, %c0_4] : memref<1x512xf32, #tpu.memory_space<vmem>>, vector<1x512xf32>
    %4 = vector.broadcast %3 : vector<1x512xf32> to vector<8x512xf32>
    %5 = arith.addf %2, %4 : vector<8x512xf32>
    %cst_5 = arith.constant dense<0.000000e+00> : vector<8xf32>
    %6 = vector.multi_reduction <add>, %5, %cst_5 [1] : vector<8x512xf32> to vector<8xf32>
    %7 = vector.shape_cast %6 : vector<8xf32> to vector<8x1xf32>
    %cst_6 = arith.constant 5.120000e+02 : f32
    %8 = vector.broadcast %cst_6 : f32 to vector<8x1xf32>
    %9 = arith.divf %7, %8 : vector<8x1xf32>
    %10 = arith.mulf %5, %5 : vector<8x512xf32>
    %cst_7 = arith.constant dense<0.000000e+00> : vector<8xf32>
    %11 = vector.multi_reduction <add>, %10, %cst_7 [1] : vector<8x512xf32> to vector<8xf32>
    %12 = vector.shape_cast %11 : vector<8xf32> to vector<8x1xf32>
    %cst_8 = arith.constant 5.120000e+02 : f32
    %13 = vector.broadcast %cst_8 : f32 to vector<8x1xf32>
    %14 = arith.divf %12, %13 : vector<8x1xf32>
    %15 = arith.mulf %9, %9 : vector<8x1xf32>
    %16 = arith.subf %14, %15 : vector<8x1xf32>
    %cst_9 = arith.constant 9.99999974E-6 : f32
    %17 = vector.broadcast %cst_9 : f32 to vector<8x1xf32>
    %18 = arith.addf %16, %17 : vector<8x1xf32>
    %19 = math.rsqrt %18 : vector<8x1xf32>
    %20 = vector.broadcast %9 : vector<8x1xf32> to vector<8x512xf32>
    %21 = arith.subf %5, %20 : vector<8x512xf32>
    %22 = arith.truncf %21 : vector<8x512xf32> to vector<8x512xbf16>
    %c0_10 = arith.constant 0 : index
    %c0_11 = arith.constant 0 : index
    %23 = vector.load %arg4[%c0_10, %c0_11] : memref<512x128xbf16, #tpu.memory_space<vmem>>, vector<512x128xbf16>
    %cst_12 = arith.constant dense<0.000000e+00> : vector<8x128xf32>
    %24 = tpu.matmul %22, %23, %cst_12 {dimension_numbers = #tpu.dot_dimension_numbers<[1], [0], [0], [1], [0, 0, 1, 1], [], []>} : vector<8x512xbf16>, vector<512x128xbf16>, vector<8x128xf32> -> vector<8x128xf32>
    %25 = vector.broadcast %19 : vector<8x1xf32> to vector<8x128xf32>
    %26 = arith.mulf %24, %25 : vector<8x128xf32>
    %c0_13 = arith.constant 0 : index
    %c0_14 = arith.constant 0 : index
    %27 = vector.load %arg5[%c0_13, %c0_14] : memref<1x128xf32, #tpu.memory_space<vmem>>, vector<1x128xf32>
    %28 = vector.broadcast %27 : vector<1x128xf32> to vector<8x128xf32>
    %29 = arith.addf %26, %28 : vector<8x128xf32>
    %c0_15 = arith.constant 0 : index
    %c0_16 = arith.constant 0 : index
    %30 = vector.load %arg6[%c0_15, %c0_16] : memref<8x128xf32, #tpu.memory_space<vmem>>, vector<8x128xf32>
    tpu.vector_store %arg6[%c0_15, %c0_16], %29 {strides = array<i32>} : memref<8x128xf32, #tpu.memory_space<vmem>>, vector<8x128xf32>,
    return
  }
  func.func @transform_0(%arg0: i32) -> (i32, i32) {
    %c0_i32 = arith.constant 0 : i32
    %c0_i32_0 = arith.constant 0 : i32
    return %arg0, %c0_i32 : i32, i32
  }
  func.func @transform_1(%arg0: i32) -> (i32, i32) {
    %c0_i32 = arith.constant 0 : i32
    %c0_i32_0 = arith.constant 0 : i32
    %c0_i32_1 = arith.constant 0 : i32
    return %c0_i32, %c0_i32_0 : i32, i32
  }
  func.func @transform_2(%arg0: i32) -> (i32, i32) {
    %c0_i32 = arith.constant 0 : i32
    %c0_i32_0 = arith.constant 0 : i32
    %c0_i32_1 = arith.constant 0 : i32
    return %c0_i32, %c0_i32_0 : i32, i32
  }
  func.func @transform_3(%arg0: i32) -> (i32, i32) {
    %c0_i32 = arith.constant 0 : i32
    %c0_i32_0 = arith.constant 0 : i32
    %c0_i32_1 = arith.constant 0 : i32
    return %c0_i32, %c0_i32_0 : i32, i32
  }
  func.func @transform_4(%arg0: i32) -> (i32, i32) {
    %c0_i32 = arith.constant 0 : i32
    %c0_i32_0 = arith.constant 0 : i32
    %c0_i32_1 = arith.constant 0 : i32
    return %c0_i32, %c0_i32_0 : i32, i32
  }
  func.func @transform_5(%arg0: i32) -> (i32, i32) {
    %c0_i32 = arith.constant 0 : i32
    %c0_i32_0 = arith.constant 0 : i32
    return %arg0, %c0_i32 : i32, i32
  }
}

</mosaic_0001>

<llo_original>
// kernel: tpu_custom_call.1
$region0: #{tpu_custom_call.1}
  #allocation0 [shape = 'u32[]', space=smem, size = 0x4, offset = 0x4, fixed_abs, tag = 'smem constant byte address 0x4 - core index']
  #allocation1 [shape = 'u32[144,128]{1,0:T(1,128)}', space=vmem, size = 0x12000, scoped, tag = 'internal scratch']
  %s0 = inlined_call_operand.hbm [shape: bf16[16,32], index: 0, kind: input, shape index: {}]
  %s1 = inlined_call_operand.hbm [shape: bf16[32,512], index: 1, kind: input, shape index: {}]
  %s2 = inlined_call_operand.vmem [shape: f32[1,512], index: 2, kind: input, shape index: {}]
  %s3 = inlined_call_operand.hbm [shape: bf16[512,128], index: 3, kind: input, shape index: {}]
  %s4 = inlined_call_operand.vmem [shape: f32[1,128], index: 4, kind: input, shape index: {}]
  %s5 = inlined_call_operand.hbm [shape: f32[16,128], index: 5, kind: output, shape index: {}]
  %s6 = sld [smem:[#allocation0]]
  $region65: #{tpu_custom_call.1} parent=0
    _
  %s8 = ssub.s32 1, %s6
  %s9 = scalar_select 0, %s8, %s6
  $region1: #{tpu_custom_call.1} parent=0
    #allocation2 [shape = 'u8[4096]{0}', space=vmem, size = 0x1000, scoped, tag = 'input window, operand 0']
    #allocation3 [shape = 's32[2]{0}', space=sflag, size = 0x8, scoped, tag = 'scoped memory for tpu_custom_call.1']
    #allocation4 [shape = 's32[2]{0}', space=sflag, size = 0x8, scoped, tag = 'scoped memory for tpu_custom_call.1']
    #allocation5 [shape = 'u8[32768]{0}', space=vmem, size = 0x8000, scoped, tag = 'input window, operand 1, single buffered']
    #allocation6 [shape = 's32[1]{0}', space=sflag, size = 0x4, scoped, tag = 'scoped memory for tpu_custom_call.1']
    #allocation7 [shape = 'u8[131072]{0}', space=vmem, size = 0x20000, scoped, tag = 'input window, operand 3, single buffered']
    #allocation8 [shape = 'u8[8192]{0}', space=vmem, size = 0x2000, scoped, tag = 'output window, operand 0']
    %10 = vsyncpa [#allocation3], 0
    %s11 = scalar_lea.sflag [#allocation3], 1
    %12 = vsyncpa %s11, 0
    %13 = vsyncpa [#allocation6], 0
    %14 = vsyncpa [#allocation4], 0
    %s15 = scalar_lea.sflag [#allocation4], 1
    %16 = vsyncpa %s15, 0
    loop: start=0, step=1, limit=4
    $region2: #{tpu_custom_call.1} parent=1 // loop_pre_header
      _
    $region3: #{tpu_custom_call.1} parent=1 // loop_header
      %s18 = sphi 0, %s22
      %p19 = scmp.ge.s32.totalorder %s18, 4
      %s28 = sphi 0, %s30
      %s31 = sphi 0, %s28
      %s32 = sphi 0, %s31
      %s48 = sphi 0, %s32
      %s52 = sphi 0, %s52
      %s54 = sphi 0, %s52
      %s55 = sphi 0, %s54
      %s69 = sphi 0, %s55
      %s73 = sphi 0, %s73
      %s75 = sphi 0, %s73
      %s76 = sphi 0, %s75
      %s90 = sphi 0, %s76
      %s94 = sphi 0, %s94
      %s96 = sphi 0, %s94
      %s97 = sphi 0, %s96
      %s111 = sphi 0, %s97
      %s115 = sphi 0, %s115
      %s117 = sphi 0, %s115
      %s118 = sphi 0, %s117
      %s132 = sphi 0, %s118
      %s138 = sphi 0, %s140
      %s141 = sphi 0, %s138
      %s142 = sphi 0, %s141
      %s158 = sphi 0, %s142
    $region4: #{tpu_custom_call.1} parent=1 // loop_header_branch
      %21 = sbr.rel (%p19) target = $region8
    $region5: #{tpu_custom_call.1} parent=1 // loop_body
      %s23 = ssub.s32 %s18, 1
      %s24 = ssub.s32 %s18, 2
      %s25 = sadd.s32 %s18, 1
      %s26 = ssub.s32 %s18, %s25
      %p27 = scmp.eq.s32.totalorder %s26, 0
      %s29 = sadd.s32 %s28, 1
      %s30 = scalar_select %p27, %s28, %s29
      %p33 = pneg %p27
      %p34 = scmp.eq.s32.totalorder %s18, 1
      %p35 = por %p33, %p34
      %p36 = scmp.ne.s32.totalorder %s28, %s31
      %p37 = scmp.eq.s32.totalorder %s18, 0
      %p38 = por %p36, %p37
      %p39 = scmp.ne.s32.totalorder %s28, %s31
      %p40 = scmp.eq.s32.totalorder %s23, 1
      %p41 = por %p39, %p40
      %p42 = scmp.ne.s32.totalorder %s31, %s32
      %p43 = scmp.eq.s32.totalorder %s23, 0
      %p44 = por %p42, %p43
      %p45 = scmp.ne.s32.totalorder %s31, %s32
      %p46 = scmp.eq.s32.totalorder %s24, 1
      %p47 = por %p45, %p46
      %p49 = scmp.ne.s32.totalorder %s32, %s48
      %p50 = scmp.eq.s32.totalorder %s24, 0
      %p51 = por %p49, %p50
      %s53 = sadd.s32 %s52, 1
      %p56 = scmp.eq.s32.totalorder %s18, 1
      %p57 = scmp.ne.s32.totalorder %s52, %s54
      %p58 = scmp.eq.s32.totalorder %s18, 0
      %p59 = por %p57, %p58
      %p60 = scmp.ne.s32.totalorder %s52, %s54
      %p61 = scmp.eq.s32.totalorder %s23, 1
      %p62 = por %p60, %p61
      %p63 = scmp.ne.s32.totalorder %s54, %s55
      %p64 = scmp.eq.s32.totalorder %s23, 0
      %p65 = por %p63, %p64
      %p66 = scmp.ne.s32.totalorder %s54, %s55
      %p67 = scmp.eq.s32.totalorder %s24, 1
      %p68 = por %p66, %p67
      %p70 = scmp.ne.s32.totalorder %s55, %s69
      %p71 = scmp.eq.s32.totalorder %s24, 0
      %p72 = por %p70, %p71
      %s74 = sadd.s32 %s73, 1
      %p77 = scmp.eq.s32.totalorder %s18, 1
      %p78 = scmp.ne.s32.totalorder %s73, %s75
      %p79 = scmp.eq.s32.totalorder %s18, 0
      %p80 = por %p78, %p79
      %p81 = scmp.ne.s32.totalorder %s73, %s75
      %p82 = scmp.eq.s32.totalorder %s23, 1
      %p83 = por %p81, %p82
      %p84 = scmp.ne.s32.totalorder %s75, %s76
      %p85 = scmp.eq.s32.totalorder %s23, 0
      %p86 = por %p84, %p85
      %p87 = scmp.ne.s32.totalorder %s75, %s76
      %p88 = scmp.eq.s32.totalorder %s24, 1
      %p89 = por %p87, %p88
      %p91 = scmp.ne.s32.totalorder %s76, %s90
      %p92 = scmp.eq.s32.totalorder %s24, 0
      %p93 = por %p91, %p92
      %s95 = sadd.s32 %s94, 1
      %p98 = scmp.eq.s32.totalorder %s18, 1
      %p99 = scmp.ne.s32.totalorder %s94, %s96
      %p100 = scmp.eq.s32.totalorder %s18, 0
      %p101 = por %p99, %p100
      %p102 = scmp.ne.s32.totalorder %s94, %s96
      %p103 = scmp.eq.s32.totalorder %s23, 1
      %p104 = por %p102, %p103
      %p105 = scmp.ne.s32.totalorder %s96, %s97
      %p106 = scmp.eq.s32.totalorder %s23, 0
      %p107 = por %p105, %p106
      %p108 = scmp.ne.s32.totalorder %s96, %s97
      %p109 = scmp.eq.s32.totalorder %s24, 1
      %p110 = por %p108, %p109
      %p112 = scmp.ne.s32.totalorder %s97, %s111
      %p113 = scmp.eq.s32.totalorder %s24, 0
      %p114 = por %p112, %p113
      %s116 = sadd.s32 %s115, 1
      %p119 = scmp.eq.s32.totalorder %s18, 1
      %p120 = scmp.ne.s32.totalorder %s115, %s117
      %p121 = scmp.eq.s32.totalorder %s18, 0
      %p122 = por %p120, %p121
      %p123 = scmp.ne.s32.totalorder %s115, %s117
      %p124 = scmp.eq.s32.totalorder %s23, 1
      %p125 = por %p123, %p124
      %p126 = scmp.ne.s32.totalorder %s117, %s118
      %p127 = scmp.eq.s32.totalorder %s23, 0
      %p128 = por %p126, %p127
      %p129 = scmp.ne.s32.totalorder %s117, %s118
      %p130 = scmp.eq.s32.totalorder %s24, 1
      %p131 = por %p129, %p130
      %p133 = scmp.ne.s32.totalorder %s118, %s132
      %p134 = scmp.eq.s32.totalorder %s24, 0
      %p135 = por %p133, %p134
      %s136 = ssub.s32 %s18, %s25
      %p137 = scmp.eq.s32.totalorder %s136, 0
      %s139 = sadd.s32 %s138, 1
      %s140 = scalar_select %p137, %s138, %s139
      %p143 = pneg %p137
      %p144 = scmp.eq.s32.totalorder %s18, 1
      %p145 = por %p143, %p144
      %p146 = scmp.ne.s32.totalorder %s138, %s141
      %p147 = scmp.eq.s32.totalorder %s18, 0
      %p148 = por %p146, %p147
      %p149 = scmp.ne.s32.totalorder %s138, %s141
      %p150 = scmp.eq.s32.totalorder %s23, 1
      %p151 = por %p149, %p150
      %p152 = scmp.ne.s32.totalorder %s141, %s142
      %p153 = scmp.eq.s32.totalorder %s23, 0
      %p154 = por %p152, %p153
      %p155 = scmp.ne.s32.totalorder %s141, %s142
      %p156 = scmp.eq.s32.totalorder %s24, 1
      %p157 = por %p155, %p156
      %p159 = scmp.ne.s32.totalorder %s142, %s158
      %p160 = scmp.eq.s32.totalorder %s24, 0
      %p161 = por %p159, %p160
      %p162 = scmp.le.s32.totalorder 1, %s18
      %p163 = scmp.lt.s32.totalorder %s18, 3
      %p164 = pnand %p162, %p163
      %p165 = pneg %p164
      // Predicated region
      $region9: #{tpu_custom_call.1} parent=5 // pred_check
        _
      $region10: #{tpu_custom_call.1} parent=5 // pred_check_branch
        %167 = sbr.rel (%p164) target = $region12
      $region11: #{tpu_custom_call.1} parent=5 // pred_region
        %s168 = ssub.s32 %s18, 1
        // Predicated region
        $region13: #{tpu_custom_call.1} parent=11 // pred_check
          %p169 = pneg %p65
        $region14: #{tpu_custom_call.1} parent=11 // pred_check_branch
          %171 = sbr.rel (%p169) target = $region16
        $region15: #{tpu_custom_call.1} parent=11 // pred_region
          %s173 = ssub.s32 1024, 1024
          %174 = vsyncadd [#allocation6], %s173
          %s175 = sshll.u32 [#allocation5], 4
          %s176 = int_to_ptr.vmem [resolvable:$true] %s175
          %181 = dma.hbm_to_vmem [thread:$0]  %s1, 1024, %s176, [#allocation6], 256, 256, 16
        $region16: #{tpu_custom_call.1} parent=11 // pred_fallthru
          _
        // Predicated region
        $region17: #{tpu_custom_call.1} parent=11 // pred_check
          %p182 = pneg %p86
        $region18: #{tpu_custom_call.1} parent=11 // pred_check_branch
          %184 = sbr.rel (%p182) target = $region20
        $region19: #{tpu_custom_call.1} parent=11 // pred_region
          _
        $region20: #{tpu_custom_call.1} parent=11 // pred_fallthru
          _
        // Predicated region
        $region21: #{tpu_custom_call.1} parent=11 // pred_check
          %p185 = pneg %p107
        $region22: #{tpu_custom_call.1} parent=11 // pred_check_branch
          %187 = sbr.rel (%p185) target = $region24
        $region23: #{tpu_custom_call.1} parent=11 // pred_region
          %s189 = ssub.s32 4096, 4096
          %190 = vsyncadd [#allocation6], %s189
          %s191 = sshll.u32 [#allocation7], 4
          %s192 = int_to_ptr.vmem [resolvable:$true] %s191
          %197 = dma.hbm_to_vmem [thread:$0]  %s3, 4096, %s192, [#allocation6], 64, 64, 4
        $region24: #{tpu_custom_call.1} parent=11 // pred_fallthru
          _
        // Predicated region
        $region25: #{tpu_custom_call.1} parent=11 // pred_check
          %p198 = pneg %p128
        $region26: #{tpu_custom_call.1} parent=11 // pred_check_branch
          %200 = sbr.rel (%p198) target = $region28
        $region27: #{tpu_custom_call.1} parent=11 // pred_region
          _
        $region28: #{tpu_custom_call.1} parent=11 // pred_fallthru
          _
      $region12: #{tpu_custom_call.1} parent=5 // pred_fallthru
        _
      %p201 = scmp.lt.s32.totalorder %s18, 2
      // Predicated region
      $region29: #{tpu_custom_call.1} parent=5 // pred_check
        %p202 = pneg %p201
      $region30: #{tpu_custom_call.1} parent=5 // pred_check_branch
        %204 = sbr.rel (%p202) target = $region32
      $region31: #{tpu_custom_call.1} parent=5 // pred_region
        // Predicated region
        $region33: #{tpu_custom_call.1} parent=31 // pred_check
          %p205 = pneg %p38
        $region34: #{tpu_custom_call.1} parent=31 // pred_check_branch
          %207 = sbr.rel (%p205) target = $region36
        $region35: #{tpu_custom_call.1} parent=31 // pred_region
          %s208 = sand.u32 %s28, 1
          %s209 = scalar_lea.sflag [#allocation3], %s208
          %s210 = sand.u32 %s28, 1
          %s211 = smul.addr %s210, 4
          %s212 = scalar_lea.vmem [#allocation2], %s211
          %s214 = ssub.s32 64, 64
          %215 = vsyncadd %s209, %s214
          %s216 = smul.addr %s18, 64
          %s217 = scalar_lea.hbm %s0, %s216
          %s219 = sshll.u32 %s212, 4
          %s220 = int_to_ptr.vmem [resolvable:$true] %s219
          %222 = dma.hbm_to_vmem [thread:$0]  %s217, 64, %s220, %s209
        $region36: #{tpu_custom_call.1} parent=31 // pred_fallthru
          _
      $region32: #{tpu_custom_call.1} parent=5 // pred_fallthru
        _
      %p223 = scmp.le.s32.totalorder 1, %s18
      %p224 = scmp.lt.s32.totalorder %s18, 3
      %p225 = pnand %p223, %p224
      %p226 = pneg %p225
      // Predicated region
      $region37: #{tpu_custom_call.1} parent=5 // pred_check
        _
      $region38: #{tpu_custom_call.1} parent=5 // pred_check_branch
        %228 = sbr.rel (%p225) target = $region40
      $region39: #{tpu_custom_call.1} parent=5 // pred_region
        %s229 = ssub.s32 %s18, 1
        %s230 = sand.u32 %s31, 1
        %s231 = scalar_lea.sflag [#allocation3], %s230
        %s232 = sand.u32 %s31, 1
        %s233 = smul.addr %s232, 4
        %s234 = scalar_lea.vmem [#allocation2], %s233
        // Predicated region
        $region41: #{tpu_custom_call.1} parent=39 // pred_check
          %p235 = pneg %p44
        $region42: #{tpu_custom_call.1} parent=39 // pred_check_branch
          %237 = sbr.rel (%p235) target = $region44
        $region43: #{tpu_custom_call.1} parent=39 // pred_region
          %238 = dma.done %s231, 64
        $region44: #{tpu_custom_call.1} parent=39 // pred_fallthru
          _
        // Predicated region
        $region45: #{tpu_custom_call.1} parent=39 // pred_check
          %p239 = pneg %p65
        $region46: #{tpu_custom_call.1} parent=39 // pred_check_branch
          %241 = sbr.rel (%p239) target = $region48
        $region47: #{tpu_custom_call.1} parent=39 // pred_region
          %242 = dma.done [#allocation6], 1024
        $region48: #{tpu_custom_call.1} parent=39 // pred_fallthru
          _
        // Predicated region
        $region49: #{tpu_custom_call.1} parent=39 // pred_check
          %p243 = pneg %p107
        $region50: #{tpu_custom_call.1} parent=39 // pred_check_branch
          %245 = sbr.rel (%p243) target = $region52
        $region51: #{tpu_custom_call.1} parent=39 // pred_region
          %246 = dma.done [#allocation6], 4096
        $region52: #{tpu_custom_call.1} parent=39 // pred_fallthru
          _
        %s247 = sand.u32 %s31, 1
        %s248 = scalar_lea.sflag [#allocation3], %s247
        %s249 = sand.u32 %s31, 1
        %s250 = smul.addr %s249, 4
        %s251 = scalar_lea.vmem [#allocation2], %s250
        %p252 = pneg %p44
        %p253 = pneg %p41
        %p254 = pneg %p65
        %p255 = pneg %p62
        %p256 = pneg %p86
        %p257 = pneg %p83
        %p258 = pneg %p107
        %p259 = pneg %p104
        %p260 = pneg %p128
        %p261 = pneg %p125
        %p262 = pneg %p154
        %p263 = pneg %p151
        %s264 = sand.u32 %s141, 1
        %s265 = scalar_lea.sflag [#allocation4], %s264
        %s266 = sand.u32 %s141, 1
        %s267 = smul.addr %s266, 8
        %s268 = scalar_lea.vmem [#allocation8], %s267
        %v270 = vld [vmem:[%s234] sm:$0xf]
        %v271 = vld [vmem:[#allocation5] sm:$0xff]
        %v272 = vld [vmem:[#allocation5 + $0x8] sm:$0xff]
        %v273 = vld [vmem:[#allocation5 + $0x10] sm:$0xff]
        %v274 = vld [vmem:[#allocation5 + $0x18] sm:$0xff]
        %v275 = vld [vmem:[#allocation5 + $0x20] sm:$0xff]
        %v276 = vld [vmem:[#allocation5 + $0x28] sm:$0xff]
        %v277 = vld [vmem:[#allocation5 + $0x30] sm:$0xff]
        %v278 = vld [vmem:[#allocation5 + $0x38] sm:$0xff]
        %v279 = vld [vmem:[%s2] sm:$0xf]
        %v281 = vlaneseq
        %v282 = vshrl.u32 %v281, 7
        %v283 = vsub.s32 0, %v282
        %v284 = vrot.slane %v279, %v283
        %v285 = vlaneseq
        %v286 = vshrl.u32 %v285, 7
        %v287 = vsub.s32 1, %v286
        %v288 = vrot.slane %v279, %v287
        %v289 = vlaneseq
        %v290 = vshrl.u32 %v289, 7
        %v291 = vsub.s32 2, %v290
        %v292 = vrot.slane %v279, %v291
        %v293 = vlaneseq
        %v294 = vshrl.u32 %v293, 7
        %v295 = vsub.s32 3, %v294
        %v296 = vrot.slane %v279, %v295
        %v309 = vunpack.c.l.b16 %v271
        %v310 = vunpack.c.h.b16 %v271
        %v311 = vunpack.c.l.b16 %v272
        %v312 = vunpack.c.h.b16 %v272
        %v313 = vunpack.c.l.b16 %v273
        %v314 = vunpack.c.h.b16 %v273
        %v315 = vunpack.c.l.b16 %v274
        %v316 = vunpack.c.h.b16 %v274
        %v317 = vunpack.c.l.b16 %v275
        %v318 = vunpack.c.h.b16 %v275
        %v319 = vunpack.c.l.b16 %v276
        %v320 = vunpack.c.h.b16 %v276
        %v321 = vunpack.c.l.b16 %v277
        %v322 = vunpack.c.h.b16 %v277
        %v323 = vunpack.c.l.b16 %v278
        %v324 = vunpack.c.h.b16 %v278
        %v325 = vpack.c.b16 %v313, %v309
        %v326 = vpack.c.b16 %v314, %v310
        %v327 = vpack.c.b16 %v315, %v311
        %v328 = vpack.c.b16 %v316, %v312
        %v329 = vpack.c.b16 %v321, %v317
        %v330 = vpack.c.b16 %v322, %v318
        %v331 = vpack.c.b16 %v323, %v319
        %v332 = vpack.c.b16 %v324, %v320
        %vm341 = vcmask 261120
        %v343 = vsel %vm341, %v270, 0
        %345 = vmatprep.subr.bf16.mxu0 %v326
        %346 = vmatpush1.bf16.msra.mxu0 %v325
        %347 = vmatprep.subr.bf16.mxu0 %v330
        %348 = vmatpush1.bf16.msra.mxu0 %v329
        %349 = vmatprep.subr.bf16.mxu0 0
        %350 = vmatpush1.bf16.msra.mxu0 0
        %351 = vmatprep.subr.bf16.mxu0 0
        %352 = vmatpush1.bf16.msra.mxu0 0
        %353 = vmatprep.subr.bf16.mxu0 0
        %354 = vmatpush1.bf16.msra.mxu0 0
        %355 = vmatprep.subr.bf16.mxu0 0
        %356 = vmatpush1.bf16.msra.mxu0 0
        %357 = vmatprep.subr.bf16.mxu0 0
        %358 = vmatpush1.bf16.msra.mxu0 0
        %359 = vmatprep.subr.bf16.mxu0 0
        %360 = vmatpush1.bf16.msra.mxu0 0
        %361 = vmatprep.subr.bf16.mxu0 0
        %362 = vmatpush1.bf16.msra.mxu0 0
        %363 = vmatprep.subr.bf16.mxu0 0
        %364 = vmatpush1.bf16.msra.mxu0 0
        %365 = vmatprep.subr.bf16.mxu0 0
        %366 = vmatpush1.bf16.msra.mxu0 0
        %367 = vmatprep.subr.bf16.mxu0 0
        %368 = vmatpush1.bf16.msra.mxu0 0
        %369 = vmatprep.subr.bf16.mxu0 0
        %370 = vmatpush1.bf16.msra.mxu0 0
        %371 = vmatprep.subr.bf16.mxu0 0
        %372 = vmatpush1.bf16.msra.mxu0 0
        %373 = vmatprep.subr.bf16.mxu0 0
        %374 = vmatpush1.bf16.msra.mxu0 0
        %375 = vmatprep.subr.bf16.mxu0 0
        %376 = vmatpush1.bf16.msra.mxu0 0
        %377 = vmatprep.mubr.bf16.mxu0 0
        %378 = vmatmul.mubr.bf16.gmra.mrb[0].mxu0 %v343
        %v379 = vpop.f32.mrb[0].mxu0
        %v380 = vadd.f32 %v284, %v379
        %v381 = vpop.f32.mrb[0].mxu0
        %v382 = vadd.f32 %v288, %v381
        %v383 = vpop.f32.mrb[0].mxu0
        %v384 = vpop.f32.mrb[0].mxu0
        %385 = vdwg.mxu0
        %386 = vmatprep.subr.bf16.mxu0 %v328
        %387 = vmatpush1.bf16.msra.mxu0 %v327
        %388 = vmatprep.subr.bf16.mxu0 %v332
        %389 = vmatpush1.bf16.msra.mxu0 %v331
        %390 = vmatprep.subr.bf16.mxu0 0
        %391 = vmatpush1.bf16.msra.mxu0 0
        %392 = vmatprep.subr.bf16.mxu0 0
        %393 = vmatpush1.bf16.msra.mxu0 0
        %394 = vmatprep.subr.bf16.mxu0 0
        %395 = vmatpush1.bf16.msra.mxu0 0
        %396 = vmatprep.subr.bf16.mxu0 0
        %397 = vmatpush1.bf16.msra.mxu0 0
        %398 = vmatprep.subr.bf16.mxu0 0
        %399 = vmatpush1.bf16.msra.mxu0 0
        %400 = vmatprep.subr.bf16.mxu0 0
        %401 = vmatpush1.bf16.msra.mxu0 0
        %402 = vmatprep.subr.bf16.mxu0 0
        %403 = vmatpush1.bf16.msra.mxu0 0
        %404 = vmatprep.subr.bf16.mxu0 0
        %405 = vmatpush1.bf16.msra.mxu0 0
        %406 = vmatprep.subr.bf16.mxu0 0
        %407 = vmatpush1.bf16.msra.mxu0 0
        %408 = vmatprep.subr.bf16.mxu0 0
        %409 = vmatpush1.bf16.msra.mxu0 0
        %410 = vmatprep.subr.bf16.mxu0 0
        %411 = vmatpush1.bf16.msra.mxu0 0
        %412 = vmatprep.subr.bf16.mxu0 0
        %413 = vmatpush1.bf16.msra.mxu0 0
        %414 = vmatprep.subr.bf16.mxu0 0
        %415 = vmatpush1.bf16.msra.mxu0 0
        %416 = vmatprep.subr.bf16.mxu0 0
        %417 = vmatpush1.bf16.msra.mxu0 0
        %418 = vmatprep.mubr.bf16.mxu0 0
        %419 = vmatmul.mubr.bf16.gmra.mrb[0].mxu0 %v343
        %v420 = vpop.f32.mrb[0].mxu0
        %v421 = vadd.f32 %v292, %v420
        %v422 = vpop.f32.mrb[0].mxu0
        %v423 = vadd.f32 %v296, %v422
        %v424 = vpop.f32.mrb[0].mxu0
        %v425 = vpop.f32.mrb[0].mxu0
        %426 = vdwg.mxu0
        %v427 = vadd.f32 %v380, %v382
        %v428 = vadd.f32 %v427, %v421
        %v429 = vadd.f32 %v428, %v423
        %430 = vadd.xlane.f32.xlu0 %v429
        %v431 = vpop.xlane.xlu0 %430
        %v432 = vrcp.pop 512.0
        %v433 = vmul.f32 %v431, %v432
        %v434 = vmul.f32 %v380, %v380
        %v435 = vmul.f32 %v382, %v382
        %v436 = vmul.f32 %v421, %v421
        %v437 = vmul.f32 %v423, %v423
        %v438 = vadd.f32 %v434, %v435
        %v439 = vadd.f32 %v438, %v436
        %v440 = vadd.f32 %v439, %v437
        %441 = vadd.xlane.f32.xlu0 %v440
        %v442 = vpop.xlane.xlu0 %441
        %v443 = vmul.f32 %v442, %v432
        %v444 = vmul.f32 %v433, %v433
        %v445 = vsub.f32 %v443, %v444
        %v446 = vadd.f32 %v445, 1e-05
        %v447 = vrsqrt.pop %v446
        %v448 = vsub.f32 %v380, %v433
        %v449 = vsub.f32 %v382, %v433
        %v450 = vsub.f32 %v421, %v433
        %v451 = vsub.f32 %v423, %v433
        %v452 = vpack.c.bf16 %v448, %v448
        %v453 = vpack.c.bf16 %v449, %v449
        %v454 = vpack.c.bf16 %v450, %v450
        %v455 = vpack.c.bf16 %v451, %v451
        %v456 = vld [vmem:[#allocation7] sm:$0xf]
        %v457 = vld [vmem:[#allocation7 + $0x4] sm:$0xf]
        %v458 = vld [vmem:[#allocation7 + $0x8] sm:$0xf]
        %v459 = vld [vmem:[#allocation7 + $0xc] sm:$0xf]
        %v460 = vld [vmem:[#allocation7 + $0x10] sm:$0xf]
        %v461 = vld [vmem:[#allocation7 + $0x14] sm:$0xf]
        %v462 = vld [vmem:[#allocation7 + $0x18] sm:$0xf]
        %v463 = vld [vmem:[#allocation7 + $0x1c] sm:$0xf]
        %v464 = vld [vmem:[#allocation7 + $0x20] sm:$0xf]
        %v465 = vld [vmem:[#allocation7 + $0x24] sm:$0xf]
        %v466 = vld [vmem:[#allocation7 + $0x28] sm:$0xf]
        %v467 = vld [vmem:[#allocation7 + $0x2c] sm:$0xf]
        %v468 = vld [vmem:[#allocation7 + $0x30] sm:$0xf]
        %v469 = vld [vmem:[#allocation7 + $0x34] sm:$0xf]
        %v470 = vld [vmem:[#allocation7 + $0x38] sm:$0xf]
        %v471 = vld [vmem:[#allocation7 + $0x3c] sm:$0xf]
        %v472 = vld [vmem:[#allocation7 + $0x40] sm:$0xf]
        %v473 = vld [vmem:[#allocation7 + $0x44] sm:$0xf]
        %v474 = vld [vmem:[#allocation7 + $0x48] sm:$0xf]
        %v475 = vld [vmem:[#allocation7 + $0x4c] sm:$0xf]
        %v476 = vld [vmem:[#allocation7 + $0x50] sm:$0xf]
        %v477 = vld [vmem:[#allocation7 + $0x54] sm:$0xf]
        %v478 = vld [vmem:[#allocation7 + $0x58] sm:$0xf]
        %v479 = vld [vmem:[#allocation7 + $0x5c] sm:$0xf]
        %v480 = vld [vmem:[#allocation7 + $0x60] sm:$0xf]
        %v481 = vld [vmem:[#allocation7 + $0x64] sm:$0xf]
        %v482 = vld [vmem:[#allocation7 + $0x68] sm:$0xf]
        %v483 = vld [vmem:[#allocation7 + $0x6c] sm:$0xf]
        %v484 = vld [vmem:[#allocation7 + $0x70] sm:$0xf]
        %v485 = vld [vmem:[#allocation7 + $0x74] sm:$0xf]
        %v486 = vld [vmem:[#allocation7 + $0x78] sm:$0xf]
        %v487 = vld [vmem:[#allocation7 + $0x7c] sm:$0xf]
        %v488 = vld [vmem:[#allocation7 + $0x80] sm:$0xf]
        %v489 = vld [vmem:[#allocation7 + $0x84] sm:$0xf]
        %v490 = vld [vmem:[#allocation7 + $0x88] sm:$0xf]
        %v491 = vld [vmem:[#allocation7 + $0x8c] sm:$0xf]
        %v492 = vld [vmem:[#allocation7 + $0x90] sm:$0xf]
        %v493 = vld [vmem:[#allocation7 + $0x94] sm:$0xf]
        %v494 = vld [vmem:[#allocation7 + $0x98] sm:$0xf]
        %v495 = vld [vmem:[#allocation7 + $0x9c] sm:$0xf]
        %v496 = vld [vmem:[#allocation7 + $0xa0] sm:$0xf]
        %v497 = vld [vmem:[#allocation7 + $0xa4] sm:$0xf]
        %v498 = vld [vmem:[#allocation7 + $0xa8] sm:$0xf]
        %v499 = vld [vmem:[#allocation7 + $0xac] sm:$0xf]
        %v500 = vld [vmem:[#allocation7 + $0xb0] sm:$0xf]
        %v501 = vld [vmem:[#allocation7 + $0xb4] sm:$0xf]
        %v502 = vld [vmem:[#allocation7 + $0xb8] sm:$0xf]
        %v503 = vld [vmem:[#allocation7 + $0xbc] sm:$0xf]
        %v504 = vld [vmem:[#allocation7 + $0xc0] sm:$0xf]
        %v505 = vld [vmem:[#allocation7 + $0xc4] sm:$0xf]
        %v506 = vld [vmem:[#allocation7 + $0xc8] sm:$0xf]
        %v507 = vld [vmem:[#allocation7 + $0xcc] sm:$0xf]
        %v508 = vld [vmem:[#allocation7 + $0xd0] sm:$0xf]
        %v509 = vld [vmem:[#allocation7 + $0xd4] sm:$0xf]
        %v510 = vld [vmem:[#allocation7 + $0xd8] sm:$0xf]
        %v511 = vld [vmem:[#allocation7 + $0xdc] sm:$0xf]
        %v512 = vld [vmem:[#allocation7 + $0xe0] sm:$0xf]
        %v513 = vld [vmem:[#allocation7 + $0xe4] sm:$0xf]
        %v514 = vld [vmem:[#allocation7 + $0xe8] sm:$0xf]
        %v515 = vld [vmem:[#allocation7 + $0xec] sm:$0xf]
        %v516 = vld [vmem:[#allocation7 + $0xf0] sm:$0xf]
        %v517 = vld [vmem:[#allocation7 + $0xf4] sm:$0xf]
        %v518 = vld [vmem:[#allocation7 + $0xf8] sm:$0xf]
        %v519 = vld [vmem:[#allocation7 + $0xfc] sm:$0xf]
        %v584 = vunpack.c.l.b16 %v456
        %v585 = vunpack.c.l.b16 %v457
        %v586 = vunpack.c.l.b16 %v458
        %v587 = vunpack.c.l.b16 %v459
        %v588 = vunpack.c.l.b16 %v460
        %v589 = vunpack.c.l.b16 %v461
        %v590 = vunpack.c.l.b16 %v462
        %v591 = vunpack.c.l.b16 %v463
        %v592 = vunpack.c.l.b16 %v464
        %v593 = vunpack.c.l.b16 %v465
        %v594 = vunpack.c.l.b16 %v466
        %v595 = vunpack.c.l.b16 %v467
        %v596 = vunpack.c.l.b16 %v468
        %v597 = vunpack.c.l.b16 %v469
        %v598 = vunpack.c.l.b16 %v470
        %v599 = vunpack.c.l.b16 %v471
        %v600 = vunpack.c.l.b16 %v472
        %v601 = vunpack.c.l.b16 %v473
        %v602 = vunpack.c.l.b16 %v474
        %v603 = vunpack.c.l.b16 %v475
        %v604 = vunpack.c.l.b16 %v476
        %v605 = vunpack.c.l.b16 %v477
        %v606 = vunpack.c.l.b16 %v478
        %v607 = vunpack.c.l.b16 %v479
        %v608 = vunpack.c.l.b16 %v480
        %v609 = vunpack.c.l.b16 %v481
        %v610 = vunpack.c.l.b16 %v482
        %v611 = vunpack.c.l.b16 %v483
        %v612 = vunpack.c.l.b16 %v484
        %v613 = vunpack.c.l.b16 %v485
        %v614 = vunpack.c.l.b16 %v486
        %v615 = vunpack.c.l.b16 %v487
        %v616 = vunpack.c.l.b16 %v488
        %v617 = vunpack.c.l.b16 %v489
        %v618 = vunpack.c.l.b16 %v490
        %v619 = vunpack.c.l.b16 %v491
        %v620 = vunpack.c.l.b16 %v492
        %v621 = vunpack.c.l.b16 %v493
        %v622 = vunpack.c.l.b16 %v494
        %v623 = vunpack.c.l.b16 %v495
        %v624 = vunpack.c.l.b16 %v496
        %v625 = vunpack.c.l.b16 %v497
        %v626 = vunpack.c.l.b16 %v498
        %v627 = vunpack.c.l.b16 %v499
        %v628 = vunpack.c.l.b16 %v500
        %v629 = vunpack.c.l.b16 %v501
        %v630 = vunpack.c.l.b16 %v502
        %v631 = vunpack.c.l.b16 %v503
        %v632 = vunpack.c.l.b16 %v504
        %v633 = vunpack.c.l.b16 %v505
        %v634 = vunpack.c.l.b16 %v506
        %v635 = vunpack.c.l.b16 %v507
        %v636 = vunpack.c.l.b16 %v508
        %v637 = vunpack.c.l.b16 %v509
        %v638 = vunpack.c.l.b16 %v510
        %v639 = vunpack.c.l.b16 %v511
        %v640 = vunpack.c.l.b16 %v512
        %v641 = vunpack.c.l.b16 %v513
        %v642 = vunpack.c.l.b16 %v514
        %v643 = vunpack.c.l.b16 %v515
        %v644 = vunpack.c.l.b16 %v516
        %v645 = vunpack.c.l.b16 %v517
        %v646 = vunpack.c.l.b16 %v518
        %v647 = vunpack.c.l.b16 %v519
        %v648 = vpack.c.b16 %v585, %v584
        %v649 = vpack.c.b16 %v587, %v586
        %v650 = vpack.c.b16 %v589, %v588
        %v651 = vpack.c.b16 %v591, %v590
        %v652 = vpack.c.b16 %v593, %v592
        %v653 = vpack.c.b16 %v595, %v594
        %v654 = vpack.c.b16 %v597, %v596
        %v655 = vpack.c.b16 %v599, %v598
        %v656 = vpack.c.b16 %v601, %v600
        %v657 = vpack.c.b16 %v603, %v602
        %v658 = vpack.c.b16 %v605, %v604
        %v659 = vpack.c.b16 %v607, %v606
        %v660 = vpack.c.b16 %v609, %v608
        %v661 = vpack.c.b16 %v611, %v610
        %v662 = vpack.c.b16 %v613, %v612
        %v663 = vpack.c.b16 %v615, %v614
        %v664 = vpack.c.b16 %v617, %v616
        %v665 = vpack.c.b16 %v619, %v618
        %v666 = vpack.c.b16 %v621, %v620
        %v667 = vpack.c.b16 %v623, %v622
        %v668 = vpack.c.b16 %v625, %v624
        %v669 = vpack.c.b16 %v627, %v626
        %v670 = vpack.c.b16 %v629, %v628
        %v671 = vpack.c.b16 %v631, %v630
        %v672 = vpack.c.b16 %v633, %v632
        %v673 = vpack.c.b16 %v635, %v634
        %v674 = vpack.c.b16 %v637, %v636
        %v675 = vpack.c.b16 %v639, %v638
        %v676 = vpack.c.b16 %v641, %v640
        %v677 = vpack.c.b16 %v643, %v642
        %v678 = vpack.c.b16 %v645, %v644
        %v679 = vpack.c.b16 %v647, %v646
        %712 = vmatprep.subr.bf16.mxu0 0
        %713 = vmatpush1.bf16.msra.mxu0 %v648
        %714 = vmatprep.subr.bf16.mxu0 0
        %715 = vmatpush1.bf16.msra.mxu0 %v649
        %716 = vmatprep.subr.bf16.mxu0 0
        %717 = vmatpush1.bf16.msra.mxu0 %v650
        %718 = vmatprep.subr.bf16.mxu0 0
        %719 = vmatpush1.bf16.msra.mxu0 %v651
        %720 = vmatprep.subr.bf16.mxu0 0
        %721 = vmatpush1.bf16.msra.mxu0 %v652
        %722 = vmatprep.subr.bf16.mxu0 0
        %723 = vmatpush1.bf16.msra.mxu0 %v653
        %724 = vmatprep.subr.bf16.mxu0 0
        %725 = vmatpush1.bf16.msra.mxu0 %v654
        %726 = vmatprep.subr.bf16.mxu0 0
        %727 = vmatpush1.bf16.msra.mxu0 %v655
        %728 = vmatprep.subr.bf16.mxu0 0
        %729 = vmatpush1.bf16.msra.mxu0 %v656
        %730 = vmatprep.subr.bf16.mxu0 0
        %731 = vmatpush1.bf16.msra.mxu0 %v657
        %732 = vmatprep.subr.bf16.mxu0 0
        %733 = vmatpush1.bf16.msra.mxu0 %v658
        %734 = vmatprep.subr.bf16.mxu0 0
        %735 = vmatpush1.bf16.msra.mxu0 %v659
        %736 = vmatprep.subr.bf16.mxu0 0
        %737 = vmatpush1.bf16.msra.mxu0 %v660
        %738 = vmatprep.subr.bf16.mxu0 0
        %739 = vmatpush1.bf16.msra.mxu0 %v661
        %740 = vmatprep.subr.bf16.mxu0 0
        %741 = vmatpush1.bf16.msra.mxu0 %v662
        %742 = vmatprep.subr.bf16.mxu0 0
        %743 = vmatpush1.bf16.msra.mxu0 %v663
        %744 = vmatprep.mubr.bf16.mxu0 %v453
        %745 = vmatmul.mubr.bf16.gmra.mrb[0].mxu0 %v452
        %v746 = vpop.f32.mrb[0].mxu0
        %v747 = vadd.f32 0.0, %v746
        %v748 = vpop.f32.mrb[0].mxu0
        %v749 = vpop.f32.mrb[0].mxu0
        %v750 = vpop.f32.mrb[0].mxu0
        %751 = vdwg.mxu0
        %752 = vmatprep.subr.bf16.mxu0 0
        %753 = vmatpush1.bf16.msra.mxu0 %v664
        %754 = vmatprep.subr.bf16.mxu0 0
        %755 = vmatpush1.bf16.msra.mxu0 %v665
        %756 = vmatprep.subr.bf16.mxu0 0
        %757 = vmatpush1.bf16.msra.mxu0 %v666
        %758 = vmatprep.subr.bf16.mxu0 0
        %759 = vmatpush1.bf16.msra.mxu0 %v667
        %760 = vmatprep.subr.bf16.mxu0 0
        %761 = vmatpush1.bf16.msra.mxu0 %v668
        %762 = vmatprep.subr.bf16.mxu0 0
        %763 = vmatpush1.bf16.msra.mxu0 %v669
        %764 = vmatprep.subr.bf16.mxu0 0
        %765 = vmatpush1.bf16.msra.mxu0 %v670
        %766 = vmatprep.subr.bf16.mxu0 0
        %767 = vmatpush1.bf16.msra.mxu0 %v671
        %768 = vmatprep.subr.bf16.mxu0 0
        %769 = vmatpush1.bf16.msra.mxu0 %v672
        %770 = vmatprep.subr.bf16.mxu0 0
        %771 = vmatpush1.bf16.msra.mxu0 %v673
        %772 = vmatprep.subr.bf16.mxu0 0
        %773 = vmatpush1.bf16.msra.mxu0 %v674
        %774 = vmatprep.subr.bf16.mxu0 0
        %775 = vmatpush1.bf16.msra.mxu0 %v675
        %776 = vmatprep.subr.bf16.mxu0 0
        %777 = vmatpush1.bf16.msra.mxu0 %v676
        %778 = vmatprep.subr.bf16.mxu0 0
        %779 = vmatpush1.bf16.msra.mxu0 %v677
        %780 = vmatprep.subr.bf16.mxu0 0
        %781 = vmatpush1.bf16.msra.mxu0 %v678
        %782 = vmatprep.subr.bf16.mxu0 0
        %783 = vmatpush1.bf16.msra.mxu0 %v679
        %784 = vmatprep.mubr.bf16.mxu0 %v455
        %785 = vmatmul.mubr.bf16.gmra.mrb[0].mxu0 %v454
        %v786 = vpop.f32.mrb[0].mxu0
        %v787 = vadd.f32 %v747, %v786
        %v788 = vpop.f32.mrb[0].mxu0
        %v789 = vpop.f32.mrb[0].mxu0
        %v790 = vpop.f32.mrb[0].mxu0
        %791 = vdwg.mxu0
        %v792 = vmul.f32 %v787, %v447
        %v793 = vld [vmem:[%s4] sm:$0x1]
        %v795 = vlaneseq
        %v796 = vshrl.u32 %v795, 7
        %v797 = vsub.s32 0, %v796
        %v798 = vrot.slane %v793, %v797
        %v800 = vadd.f32 %v792, %v798
        %801 = vst [vmem:[%s268] sm:$0xff] %v800
        %s802 = sand.u32 %s141, 1
        %s803 = scalar_lea.sflag [#allocation4], %s802
        %s804 = sand.u32 %s141, 1
        %s805 = smul.addr %s804, 8
        %s806 = scalar_lea.vmem [#allocation8], %s805
        // Predicated region
        $region53: #{tpu_custom_call.1} parent=39 // pred_check
          %p807 = pneg %p151
        $region54: #{tpu_custom_call.1} parent=39 // pred_check_branch
          %809 = sbr.rel (%p807) target = $region56
        $region55: #{tpu_custom_call.1} parent=39 // pred_region
          %s811 = ssub.s32 128, 128
          %812 = vsyncadd %s803, %s811
          %s813 = smul.addr %s23, 128
          %s814 = scalar_lea.hbm %s5, %s813
          %s816 = sshll.u32 %s806, 4
          %s817 = int_to_ptr.vmem [resolvable:$true] %s816
          %819 = dma.vmem_to_hbm [thread:$0]  %s817, 128, %s814, %s803
        $region56: #{tpu_custom_call.1} parent=39 // pred_fallthru
          _
      $region40: #{tpu_custom_call.1} parent=5 // pred_fallthru
        _
      %p820 = scmp.le.s32.totalorder 2, %s18
      // Predicated region
      $region57: #{tpu_custom_call.1} parent=5 // pred_check
        %p821 = pneg %p820
      $region58: #{tpu_custom_call.1} parent=5 // pred_check_branch
        %823 = sbr.rel (%p821) target = $region60
      $region59: #{tpu_custom_call.1} parent=5 // pred_region
        %s824 = ssub.s32 %s18, 2
        // Predicated region
        $region61: #{tpu_custom_call.1} parent=59 // pred_check
          %p825 = pneg %p157
        $region62: #{tpu_custom_call.1} parent=59 // pred_check_branch
          %827 = sbr.rel (%p825) target = $region64
        $region63: #{tpu_custom_call.1} parent=59 // pred_region
          %s828 = sand.u32 %s142, 1
          %s829 = scalar_lea.sflag [#allocation4], %s828
          %s830 = sand.u32 %s142, 1
          %s831 = smul.addr %s830, 8
          %s832 = scalar_lea.vmem [#allocation8], %s831
          %833 = dma.done %s829, 128
        $region64: #{tpu_custom_call.1} parent=59 // pred_fallthru
          _
      $region60: #{tpu_custom_call.1} parent=5 // pred_fallthru
        _
    $region6: #{tpu_custom_call.1} parent=1 // loop_footer
      %s22 = sadd.s32 1, %s18
    $region7: #{tpu_custom_call.1} parent=1 // loop_footer_branch
      %17 = sbr.rel target = $region3
    $region8: #{tpu_custom_call.1} parent=1 // loop_exit
      _
    %834 = vsyncpa [#allocation3], 1
    %s835 = scalar_lea.sflag [#allocation3], 1
    %836 = vsyncpa %s835, 1
    %837 = vsyncpa [#allocation6], 1
    %838 = vsyncpa [#allocation4], 1
    %s839 = scalar_lea.sflag [#allocation4], 1
    %840 = vsyncpa %s839, 1

// kernel: tpu_custom_call.1
$region0: #{tpu_custom_call.1}
  #allocation0 [shape = 'u32[]', space=smem, size = 0x4, offset = 0x4, fixed_abs, tag = 'smem constant byte address 0x4 - core index']
  #allocation1 [shape = 'u32[144,128]{1,0:T(1,128)}', space=vmem, size = 0x12000, scoped, tag = 'internal scratch']
  %s0 = inlined_call_operand.hbm [shape: bf16[16,32], index: 0, kind: input, shape index: {}]
  %s1 = inlined_call_operand.hbm [shape: bf16[32,512], index: 1, kind: input, shape index: {}]
  %s2 = inlined_call_operand.vmem [shape: f32[1,512], index: 2, kind: input, shape index: {}]
  %s3 = inlined_call_operand.hbm [shape: bf16[512,128], index: 3, kind: input, shape index: {}]
  %s4 = inlined_call_operand.vmem [shape: f32[1,128], index: 4, kind: input, shape index: {}]
  %s5 = inlined_call_operand.hbm [shape: f32[16,128], index: 5, kind: output, shape index: {}]
  %s6 = sld [smem:[#allocation0]]
  $region65: #{tpu_custom_call.1} parent=0
    _
  %s8 = ssub.s32 1, %s6
  %s9 = scalar_select 0, %s8, %s6
  $region1: #{tpu_custom_call.1} parent=0
    #allocation2 [shape = 'u8[4096]{0}', space=vmem, size = 0x1000, scoped, tag = 'input window, operand 0']
    #allocation3 [shape = 's32[2]{0}', space=sflag, size = 0x8, scoped, tag = 'scoped memory for tpu_custom_call.1']
    #allocation4 [shape = 's32[2]{0}', space=sflag, size = 0x8, scoped, tag = 'scoped memory for tpu_custom_call.1']
    #allocation5 [shape = 'u8[32768]{0}', space=vmem, size = 0x8000, scoped, tag = 'input window, operand 1, single buffered']
    #allocation6 [shape = 's32[1]{0}', space=sflag, size = 0x4, scoped, tag = 'scoped memory for tpu_custom_call.1']
    #allocation7 [shape = 'u8[131072]{0}', space=vmem, size = 0x20000, scoped, tag = 'input window, operand 3, single buffered']
    #allocation8 [shape = 'u8[8192]{0}', space=vmem, size = 0x2000, scoped, tag = 'output window, operand 0']
    %10 = vsyncpa [#allocation3], 0
    %s11 = scalar_lea.sflag [#allocation3], 1
    %12 = vsyncpa %s11, 0
    %13 = vsyncpa [#allocation6], 0
    %14 = vsyncpa [#allocation4], 0
    %s15 = scalar_lea.sflag [#allocation4], 1
    %16 = vsyncpa %s15, 0
    loop: start=0, step=1, limit=4
    $region2: #{tpu_custom_call.1} parent=1 // loop_pre_header
      _
    $region3: #{tpu_custom_call.1} parent=1 // loop_header
      %s18 = sphi 0, %s22
      %p19 = scmp.ge.s32.totalorder %s18, 4
      %s28 = sphi 0, %s30
      %s31 = sphi 0, %s28
      %s32 = sphi 0, %s31
      %s48 = sphi 0, %s32
      %s52 = sphi 0, %s52
      %s54 = sphi 0, %s52
      %s55 = sphi 0, %s54
      %s69 = sphi 0, %s55
      %s73 = sphi 0, %s73
      %s75 = sphi 0, %s73
      %s76 = sphi 0, %s75
      %s90 = sphi 0, %s76
      %s94 = sphi 0, %s94
      %s96 = sphi 0, %s94
      %s97 = sphi 0, %s96
      %s111 = sphi 0, %s97
      %s115 = sphi 0, %s115
      %s117 = sphi 0, %s115
      %s118 = sphi 0, %s117
      %s132 = sphi 0, %s118
      %s138 = sphi 0, %s140
      %s141 = sphi 0, %s138
      %s142 = sphi 0, %s141
      %s158 = sphi 0, %s142
    $region4: #{tpu_custom_call.1} parent=1 // loop_header_branch
      %21 = sbr.rel (%p19) target = $region8
    $region5: #{tpu_custom_call.1} parent=1 // loop_body
      %s23 = ssub.s32 %s18, 1
      %s24 = ssub.s32 %s18, 2
      %s25 = sadd.s32 %s18, 1
      %s26 = ssub.s32 %s18, %s25
      %p27 = scmp.eq.s32.totalorder %s26, 0
      %s29 = sadd.s32 %s28, 1
      %s30 = scalar_select %p27, %s28, %s29
      %p33 = pneg %p27
      %p34 = scmp.eq.s32.totalorder %s18, 1
      %p35 = por %p33, %p34
      %p36 = scmp.ne.s32.totalorder %s28, %s31
      %p37 = scmp.eq.s32.totalorder %s18, 0
      %p38 = por %p36, %p37
      %p39 = scmp.ne.s32.totalorder %s28, %s31
      %p40 = scmp.eq.s32.totalorder %s23, 1
      %p41 = por %p39, %p40
      %p42 = scmp.ne.s32.totalorder %s31, %s32
      %p43 = scmp.eq.s32.totalorder %s23, 0
      %p44 = por %p42, %p43
      %p45 = scmp.ne.s32.totalorder %s31, %s32
      %p46 = scmp.eq.s32.totalorder %s24, 1
      %p47 = por %p45, %p46
      %p49 = scmp.ne.s32.totalorder %s32, %s48
      %p50 = scmp.eq.s32.totalorder %s24, 0
      %p51 = por %p49, %p50
      %s53 = sadd.s32 %s52, 1
      %p56 = scmp.eq.s32.totalorder %s18, 1
      %p57 = scmp.ne.s32.totalorder %s52, %s54
      %p58 = scmp.eq.s32.totalorder %s18, 0
      %p59 = por %p57, %p58
      %p60 = scmp.ne.s32.totalorder %s52, %s54
      %p61 = scmp.eq.s32.totalorder %s23, 1
      %p62 = por %p60, %p61
      %p63 = scmp.ne.s32.totalorder %s54, %s55
      %p64 = scmp.eq.s32.totalorder %s23, 0
      %p65 = por %p63, %p64
      %p66 = scmp.ne.s32.totalorder %s54, %s55
      %p67 = scmp.eq.s32.totalorder %s24, 1
      %p68 = por %p66, %p67
      %p70 = scmp.ne.s32.totalorder %s55, %s69
      %p71 = scmp.eq.s32.totalorder %s24, 0
      %p72 = por %p70, %p71
      %s74 = sadd.s32 %s73, 1
      %p77 = scmp.eq.s32.totalorder %s18, 1
      %p78 = scmp.ne.s32.totalorder %s73, %s75
      %p79 = scmp.eq.s32.totalorder %s18, 0
      %p80 = por %p78, %p79
      %p81 = scmp.ne.s32.totalorder %s73, %s75
      %p82 = scmp.eq.s32.totalorder %s23, 1
      %p83 = por %p81, %p82
      %p84 = scmp.ne.s32.totalorder %s75, %s76
      %p85 = scmp.eq.s32.totalorder %s23, 0
      %p86 = por %p84, %p85
      %p87 = scmp.ne.s32.totalorder %s75, %s76
      %p88 = scmp.eq.s32.totalorder %s24, 1
      %p89 = por %p87, %p88
      %p91 = scmp.ne.s32.totalorder %s76, %s90
      %p92 = scmp.eq.s32.totalorder %s24, 0
      %p93 = por %p91, %p92
      %s95 = sadd.s32 %s94, 1
      %p98 = scmp.eq.s32.totalorder %s18, 1
      %p99 = scmp.ne.s32.totalorder %s94, %s96
      %p100 = scmp.eq.s32.totalorder %s18, 0
      %p101 = por %p99, %p100
      %p102 = scmp.ne.s32.totalorder %s94, %s96
      %p103 = scmp.eq.s32.totalorder %s23, 1
      %p104 = por %p102, %p103
      %p105 = scmp.ne.s32.totalorder %s96, %s97
      %p106 = scmp.eq.s32.totalorder %s23, 0
      %p107 = por %p105, %p106
      %p108 = scmp.ne.s32.totalorder %s96, %s97
      %p109 = scmp.eq.s32.totalorder %s24, 1
      %p110 = por %p108, %p109
      %p112 = scmp.ne.s32.totalorder %s97, %s111
      %p113 = scmp.eq.s32.totalorder %s24, 0
      %p114 = por %p112, %p113
      %s116 = sadd.s32 %s115, 1
      %p119 = scmp.eq.s32.totalorder %s18, 1
      %p120 = scmp.ne.s32.totalorder %s115, %s117
      %p121 = scmp.eq.s32.totalorder %s18, 0
      %p122 = por %p120, %p121
      %p123 = scmp.ne.s32.totalorder %s115, %s117
      %p124 = scmp.eq.s32.totalorder %s23, 1
      %p125 = por %p123, %p124
      %p126 = scmp.ne.s32.totalorder %s117, %s118
      %p127 = scmp.eq.s32.totalorder %s23, 0
      %p128 = por %p126, %p127
      %p129 = scmp.ne.s32.totalorder %s117, %s118
      %p130 = scmp.eq.s32.totalorder %s24, 1
      %p131 = por %p129, %p130
      %p133 = scmp.ne.s32.totalorder %s118, %s132
      %p134 = scmp.eq.s32.totalorder %s24, 0
      %p135 = por %p133, %p134
      %s136 = ssub.s32 %s18, %s25
      %p137 = scmp.eq.s32.totalorder %s136, 0
      %s139 = sadd.s32 %s138, 1
      %s140 = scalar_select %p137, %s138, %s139
      %p143 = pneg %p137
      %p144 = scmp.eq.s32.totalorder %s18, 1
      %p145 = por %p143, %p144
      %p146 = scmp.ne.s32.totalorder %s138, %s141
      %p147 = scmp.eq.s32.totalorder %s18, 0
      %p148 = por %p146, %p147
      %p149 = scmp.ne.s32.totalorder %s138, %s141
      %p150 = scmp.eq.s32.totalorder %s23, 1
      %p151 = por %p149, %p150
      %p152 = scmp.ne.s32.totalorder %s141, %s142
      %p153 = scmp.eq.s32.totalorder %s23, 0
      %p154 = por %p152, %p153
      %p155 = scmp.ne.s32.totalorder %s141, %s142
      %p156 = scmp.eq.s32.totalorder %s24, 1
      %p157 = por %p155, %p156
      %p159 = scmp.ne.s32.totalorder %s142, %s158
      %p160 = scmp.eq.s32.totalorder %s24, 0
      %p161 = por %p159, %p160
      %p162 = scmp.le.s32.totalorder 1, %s18
      %p163 = scmp.lt.s32.totalorder %s18, 3
      %p164 = pnand %p162, %p163
      %p165 = pneg %p164
      // Predicated region
      $region9: #{tpu_custom_call.1} parent=5 // pred_check
        _
      $region10: #{tpu_custom_call.1} parent=5 // pred_check_branch
        %167 = sbr.rel (%p164) target = $region12
      $region11: #{tpu_custom_call.1} parent=5 // pred_region
        %s168 = ssub.s32 %s18, 1
        // Predicated region
        $region13: #{tpu_custom_call.1} parent=11 // pred_check
          %p169 = pneg %p65
        $region14: #{tpu_custom_call.1} parent=11 // pred_check_branch
          %171 = sbr.rel (%p169) target = $region16
        $region15: #{tpu_custom_call.1} parent=11 // pred_region
          %s173 = ssub.s32 1024, 1024
          %174 = vsyncadd [#allocation6], %s173
          %s175 = sshll.u32 [#allocation5], 4
          %s176 = int_to_ptr.vmem [resolvable:$true] %s175
          %181 = dma.hbm_to_vmem [thread:$0]  %s1, 1024, %s176, [#allocation6], 256, 256, 16
        $region16: #{tpu_custom_call.1} parent=11 // pred_fallthru
          _
        // Predicated region
        $region17: #{tpu_custom_call.1} parent=11 // pred_check
          %p182 = pneg %p86
        $region18: #{tpu_custom_call.1} parent=11 // pred_check_branch
          %184 = sbr.rel (%p182) target = $region20
        $region19: #{tpu_custom_call.1} parent=11 // pred_region
          _
        $region20: #{tpu_custom_call.1} parent=11 // pred_fallthru
          _
        // Predicated region
        $region21: #{tpu_custom_call.1} parent=11 // pred_check
          %p185 = pneg %p107
        $region22: #{tpu_custom_call.1} parent=11 // pred_check_branch
          %187 = sbr.rel (%p185) target = $region24
        $region23: #{tpu_custom_call.1} parent=11 // pred_region
          %s189 = ssub.s32 4096, 4096
          %190 = vsyncadd [#allocation6], %s189
          %s191 = sshll.u32 [#allocation7], 4
          %s192 = int_to_ptr.vmem [resolvable:$true] %s191
          %197 = dma.hbm_to_vmem [thread:$0]  %s3, 4096, %s192, [#allocation6], 64, 64, 4
        $region24: #{tpu_custom_call.1} parent=11 // pred_fallthru
          _
        // Predicated region
        $region25: #{tpu_custom_call.1} parent=11 // pred_check
          %p198 = pneg %p128
        $region26: #{tpu_custom_call.1} parent=11 // pred_check_branch
          %200 = sbr.rel (%p198) target = $region28
        $region27: #{tpu_custom_call.1} parent=11 // pred_region
          _
        $region28: #{tpu_custom_call.1} parent=11 // pred_fallthru
          _
      $region12: #{tpu_custom_call.1} parent=5 // pred_fallthru
        _
      %p201 = scmp.lt.s32.totalorder %s18, 2
      // Predicated region
      $region29: #{tpu_custom_call.1} parent=5 // pred_check
        %p202 = pneg %p201
      $region30: #{tpu_custom_call.1} parent=5 // pred_check_branch
        %204 = sbr.rel (%p202) target = $region32
      $region31: #{tpu_custom_call.1} parent=5 // pred_region
        // Predicated region
        $region33: #{tpu_custom_call.1} parent=31 // pred_check
          %p205 = pneg %p38
        $region34: #{tpu_custom_call.1} parent=31 // pred_check_branch
          %207 = sbr.rel (%p205) target = $region36
        $region35: #{tpu_custom_call.1} parent=31 // pred_region
          %s208 = sand.u32 %s28, 1
          %s209 = scalar_lea.sflag [#allocation3], %s208
          %s210 = sand.u32 %s28, 1
          %s211 = smul.addr %s210, 4
          %s212 = scalar_lea.vmem [#allocation2], %s211
          %s214 = ssub.s32 64, 64
          %215 = vsyncadd %s209, %s214
          %s216 = smul.addr %s18, 64
          %s217 = scalar_lea.hbm %s0, %s216
          %s219 = sshll.u32 %s212, 4
          %s220 = int_to_ptr.vmem [resolvable:$true] %s219
          %222 = dma.hbm_to_vmem [thread:$0]  %s217, 64, %s220, %s209
        $region36: #{tpu_custom_call.1} parent=31 // pred_fallthru
          _
      $region32: #{tpu_custom_call.1} parent=5 // pred_fallthru
        _
      %p223 = scmp.le.s32.totalorder 1, %s18
      %p224 = scmp.lt.s32.totalorder %s18, 3
      %p225 = pnand %p223, %p224
      %p226 = pneg %p225
      // Predicated region
      $region37: #{tpu_custom_call.1} parent=5 // pred_check
        _
      $region38: #{tpu_custom_call.1} parent=5 // pred_check_branch
        %228 = sbr.rel (%p225) target = $region40
      $region39: #{tpu_custom_call.1} parent=5 // pred_region
        %s229 = ssub.s32 %s18, 1
        %s230 = sand.u32 %s31, 1
        %s231 = scalar_lea.sflag [#allocation3], %s230
        %s232 = sand.u32 %s31, 1
        %s233 = smul.addr %s232, 4
        %s234 = scalar_lea.vmem [#allocation2], %s233
        // Predicated region
        $region41: #{tpu_custom_call.1} parent=39 // pred_check
          %p235 = pneg %p44
        $region42: #{tpu_custom_call.1} parent=39 // pred_check_branch
          %237 = sbr.rel (%p235) target = $region44
        $region43: #{tpu_custom_call.1} parent=39 // pred_region
          %238 = dma.done %s231, 64
        $region44: #{tpu_custom_call.1} parent=39 // pred_fallthru
          _
        // Predicated region
        $region45: #{tpu_custom_call.1} parent=39 // pred_check
          %p239 = pneg %p65
        $region46: #{tpu_custom_call.1} parent=39 // pred_check_branch
          %241 = sbr.rel (%p239) target = $region48
        $region47: #{tpu_custom_call.1} parent=39 // pred_region
          %242 = dma.done [#allocation6], 1024
        $region48: #{tpu_custom_call.1} parent=39 // pred_fallthru
          _
        // Predicated region
        $region49: #{tpu_custom_call.1} parent=39 // pred_check
          %p243 = pneg %p107
        $region50: #{tpu_custom_call.1} parent=39 // pred_check_branch
          %245 = sbr.rel (%p243) target = $region52
        $region51: #{tpu_custom_call.1} parent=39 // pred_region
          %246 = dma.done [#allocation6], 4096
        $region52: #{tpu_custom_call.1} parent=39 // pred_fallthru
          _
        %s247 = sand.u32 %s31, 1
        %s248 = scalar_lea.sflag [#allocation3], %s247
        %s249 = sand.u32 %s31, 1
        %s250 = smul.addr %s249, 4
        %s251 = scalar_lea.vmem [#allocation2], %s250
        %p252 = pneg %p44
        %p253 = pneg %p41
        %p254 = pneg %p65
        %p255 = pneg %p62
        %p256 = pneg %p86
        %p257 = pneg %p83
        %p258 = pneg %p107
        %p259 = pneg %p104
        %p260 = pneg %p128
        %p261 = pneg %p125
        %p262 = pneg %p154
        %p263 = pneg %p151
        %s264 = sand.u32 %s141, 1
        %s265 = scalar_lea.sflag [#allocation4], %s264
        %s266 = sand.u32 %s141, 1
        %s267 = smul.addr %s266, 8
        %s268 = scalar_lea.vmem [#allocation8], %s267
        %v270 = vld [vmem:[%s234] sm:$0xf]
        %v271 = vld [vmem:[#allocation5] sm:$0xff]
        %v272 = vld [vmem:[#allocation5 + $0x8] sm:$0xff]
        %v273 = vld [vmem:[#allocation5 + $0x10] sm:$0xff]
        %v274 = vld [vmem:[#allocation5 + $0x18] sm:$0xff]
        %v275 = vld [vmem:[#allocation5 + $0x20] sm:$0xff]
        %v276 = vld [vmem:[#allocation5 + $0x28] sm:$0xff]
        %v277 = vld [vmem:[#allocation5 + $0x30] sm:$0xff]
        %v278 = vld [vmem:[#allocation5 + $0x38] sm:$0xff]
        %v279 = vld [vmem:[%s2] sm:$0xf]
        %v281 = vlaneseq
        %v282 = vshrl.u32 %v281, 7
        %v283 = vsub.s32 0, %v282
        %v284 = vrot.slane %v279, %v283
        %v285 = vlaneseq
        %v286 = vshrl.u32 %v285, 7
        %v287 = vsub.s32 1, %v286
        %v288 = vrot.slane %v279, %v287
        %v289 = vlaneseq
        %v290 = vshrl.u32 %v289, 7
        %v291 = vsub.s32 2, %v290
        %v292 = vrot.slane %v279, %v291
        %v293 = vlaneseq
        %v294 = vshrl.u32 %v293, 7
        %v295 = vsub.s32 3, %v294
        %v296 = vrot.slane %v279, %v295
        %v309 = vunpack.c.l.b16 %v271
        %v310 = vunpack.c.h.b16 %v271
        %v311 = vunpack.c.l.b16 %v272
        %v312 = vunpack.c.h.b16 %v272
        %v313 = vunpack.c.l.b16 %v273
        %v314 = vunpack.c.h.b16 %v273
        %v315 = vunpack.c.l.b16 %v274
        %v316 = vunpack.c.h.b16 %v274
        %v317 = vunpack.c.l.b16 %v275
        %v318 = vunpack.c.h.b16 %v275
        %v319 = vunpack.c.l.b16 %v276
        %v320 = vunpack.c.h.b16 %v276
        %v321 = vunpack.c.l.b16 %v277
        %v322 = vunpack.c.h.b16 %v277
        %v323 = vunpack.c.l.b16 %v278
        %v324 = vunpack.c.h.b16 %v278
        %v325 = vpack.c.b16 %v313, %v309
        %v326 = vpack.c.b16 %v314, %v310
        %v327 = vpack.c.b16 %v315, %v311
        %v328 = vpack.c.b16 %v316, %v312
        %v329 = vpack.c.b16 %v321, %v317
        %v330 = vpack.c.b16 %v322, %v318
        %v331 = vpack.c.b16 %v323, %v319
        %v332 = vpack.c.b16 %v324, %v320
        %vm341 = vcmask 261120
        %v343 = vsel %vm341, %v270, 0
        %345 = vmatprep.subr.bf16.mxu0 %v326
        %346 = vmatpush1.bf16.msra.mxu0 %v325
        %347 = vmatprep.subr.bf16.mxu0 %v330
        %348 = vmatpush1.bf16.msra.mxu0 %v329
        %349 = vmatprep.subr.bf16.mxu0 0
        %350 = vmatpush1.bf16.msra.mxu0 0
        %351 = vmatprep.subr.bf16.mxu0 0
        %352 = vmatpush1.bf16.msra.mxu0 0
        %353 = vmatprep.subr.bf16.mxu0 0
        %354 = vmatpush1.bf16.msra.mxu0 0
        %355 = vmatprep.subr.bf16.mxu0 0
        %356 = vmatpush1.bf16.msra.mxu0 0
        %357 = vmatprep.subr.bf16.mxu0 0
        %358 = vmatpush1.bf16.msra.mxu0 0
        %359 = vmatprep.subr.bf16.mxu0 0
        %360 = vmatpush1.bf16.msra.mxu0 0
        %361 = vmatprep.subr.bf16.mxu0 0
        %362 = vmatpush1.bf16.msra.mxu0 0
        %363 = vmatprep.subr.bf16.mxu0 0
        %364 = vmatpush1.bf16.msra.mxu0 0
        %365 = vmatprep.subr.bf16.mxu0 0
        %366 = vmatpush1.bf16.msra.mxu0 0
        %367 = vmatprep.subr.bf16.mxu0 0
        %368 = vmatpush1.bf16.msra.mxu0 0
        %369 = vmatprep.subr.bf16.mxu0 0
        %370 = vmatpush1.bf16.msra.mxu0 0
        %371 = vmatprep.subr.bf16.mxu0 0
        %372 = vmatpush1.bf16.msra.mxu0 0
        %373 = vmatprep.subr.bf16.mxu0 0
        %374 = vmatpush1.bf16.msra.mxu0 0
        %375 = vmatprep.subr.bf16.mxu0 0
        %376 = vmatpush1.bf16.msra.mxu0 0
        %377 = vmatprep.mubr.bf16.mxu0 0
        %378 = vmatmul.mubr.bf16.gmra.mrb[0].mxu0 %v343
        %v379 = vpop.f32.mrb[0].mxu0
        %v380 = vadd.f32 %v284, %v379
        %v381 = vpop.f32.mrb[0].mxu0
        %v382 = vadd.f32 %v288, %v381
        %v383 = vpop.f32.mrb[0].mxu0
        %v384 = vpop.f32.mrb[0].mxu0
        %385 = vdwg.mxu0
        %386 = vmatprep.subr.bf16.mxu0 %v328
        %387 = vmatpush1.bf16.msra.mxu0 %v327
        %388 = vmatprep.subr.bf16.mxu0 %v332
        %389 = vmatpush1.bf16.msra.mxu0 %v331
        %390 = vmatprep.subr.bf16.mxu0 0
        %391 = vmatpush1.bf16.msra.mxu0 0
        %392 = vmatprep.subr.bf16.mxu0 0
        %393 = vmatpush1.bf16.msra.mxu0 0
        %394 = vmatprep.subr.bf16.mxu0 0
        %395 = vmatpush1.bf16.msra.mxu0 0
        %396 = vmatprep.subr.bf16.mxu0 0
        %397 = vmatpush1.bf16.msra.mxu0 0
        %398 = vmatprep.subr.bf16.mxu0 0
        %399 = vmatpush1.bf16.msra.mxu0 0
        %400 = vmatprep.subr.bf16.mxu0 0
        %401 = vmatpush1.bf16.msra.mxu0 0
        %402 = vmatprep.subr.bf16.mxu0 0
        %403 = vmatpush1.bf16.msra.mxu0 0
        %404 = vmatprep.subr.bf16.mxu0 0
        %405 = vmatpush1.bf16.msra.mxu0 0
        %406 = vmatprep.subr.bf16.mxu0 0
        %407 = vmatpush1.bf16.msra.mxu0 0
        %408 = vmatprep.subr.bf16.mxu0 0
        %409 = vmatpush1.bf16.msra.mxu0 0
        %410 = vmatprep.subr.bf16.mxu0 0
        %411 = vmatpush1.bf16.msra.mxu0 0
        %412 = vmatprep.subr.bf16.mxu0 0
        %413 = vmatpush1.bf16.msra.mxu0 0
        %414 = vmatprep.subr.bf16.mxu0 0
        %415 = vmatpush1.bf16.msra.mxu0 0
        %416 = vmatprep.subr.bf16.mxu0 0
        %417 = vmatpush1.bf16.msra.mxu0 0
        %418 = vmatprep.mubr.bf16.mxu0 0
        %419 = vmatmul.mubr.bf16.gmra.mrb[0].mxu0 %v343
        %v420 = vpop.f32.mrb[0].mxu0
        %v421 = vadd.f32 %v292, %v420
        %v422 = vpop.f32.mrb[0].mxu0
        %v423 = vadd.f32 %v296, %v422
        %v424 = vpop.f32.mrb[0].mxu0
        %v425 = vpop.f32.mrb[0].mxu0
        %426 = vdwg.mxu0
        %v427 = vadd.f32 %v380, %v382
        %v428 = vadd.f32 %v427, %v421
        %v429 = vadd.f32 %v428, %v423
        %430 = vadd.xlane.f32.xlu0 %v429
        %v431 = vpop.xlane.xlu0 %430
        %v432 = vrcp.pop 512.0
        %v433 = vmul.f32 %v431, %v432
        %v434 = vmul.f32 %v380, %v380
        %v435 = vmul.f32 %v382, %v382
        %v436 = vmul.f32 %v421, %v421
        %v437 = vmul.f32 %v423, %v423
        %v438 = vadd.f32 %v434, %v435
        %v439 = vadd.f32 %v438, %v436
        %v440 = vadd.f32 %v439, %v437
        %441 = vadd.xlane.f32.xlu0 %v440
        %v442 = vpop.xlane.xlu0 %441
        %v443 = vmul.f32 %v442, %v432
        %v444 = vmul.f32 %v433, %v433
        %v445 = vsub.f32 %v443, %v444
        %v446 = vadd.f32 %v445, 1e-05
        %v447 = vrsqrt.pop %v446
        %v448 = vsub.f32 %v380, %v433
        %v449 = vsub.f32 %v382, %v433
        %v450 = vsub.f32 %v421, %v433
        %v451 = vsub.f32 %v423, %v433
        %v452 = vpack.c.bf16 %v448, %v448
        %v453 = vpack.c.bf16 %v449, %v449
        %v454 = vpack.c.bf16 %v450, %v450
        %v455 = vpack.c.bf16 %v451, %v451
        %v456 = vld [vmem:[#allocation7] sm:$0xf]
        %v457 = vld [vmem:[#allocation7 + $0x4] sm:$0xf]
        %v458 = vld [vmem:[#allocation7 + $0x8] sm:$0xf]
        %v459 = vld [vmem:[#allocation7 + $0xc] sm:$0xf]
        %v460 = vld [vmem:[#allocation7 + $0x10] sm:$0xf]
        %v461 = vld [vmem:[#allocation7 + $0x14] sm:$0xf]
        %v462 = vld [vmem:[#allocation7 + $0x18] sm:$0xf]
        %v463 = vld [vmem:[#allocation7 + $0x1c] sm:$0xf]
        %v464 = vld [vmem:[#allocation7 + $0x20] sm:$0xf]
        %v465 = vld [vmem:[#allocation7 + $0x24] sm:$0xf]
        %v466 = vld [vmem:[#allocation7 + $0x28] sm:$0xf]
        %v467 = vld [vmem:[#allocation7 + $0x2c] sm:$0xf]
        %v468 = vld [vmem:[#allocation7 + $0x30] sm:$0xf]
        %v469 = vld [vmem:[#allocation7 + $0x34] sm:$0xf]
        %v470 = vld [vmem:[#allocation7 + $0x38] sm:$0xf]
        %v471 = vld [vmem:[#allocation7 + $0x3c] sm:$0xf]
        %v472 = vld [vmem:[#allocation7 + $0x40] sm:$0xf]
        %v473 = vld [vmem:[#allocation7 + $0x44] sm:$0xf]
        %v474 = vld [vmem:[#allocation7 + $0x48] sm:$0xf]
        %v475 = vld [vmem:[#allocation7 + $0x4c] sm:$0xf]
        %v476 = vld [vmem:[#allocation7 + $0x50] sm:$0xf]
        %v477 = vld [vmem:[#allocation7 + $0x54] sm:$0xf]
        %v478 = vld [vmem:[#allocation7 + $0x58] sm:$0xf]
        %v479 = vld [vmem:[#allocation7 + $0x5c] sm:$0xf]
        %v480 = vld [vmem:[#allocation7 + $0x60] sm:$0xf]
        %v481 = vld [vmem:[#allocation7 + $0x64] sm:$0xf]
        %v482 = vld [vmem:[#allocation7 + $0x68] sm:$0xf]
        %v483 = vld [vmem:[#allocation7 + $0x6c] sm:$0xf]
        %v484 = vld [vmem:[#allocation7 + $0x70] sm:$0xf]
        %v485 = vld [vmem:[#allocation7 + $0x74] sm:$0xf]
        %v486 = vld [vmem:[#allocation7 + $0x78] sm:$0xf]
        %v487 = vld [vmem:[#allocation7 + $0x7c] sm:$0xf]
        %v488 = vld [vmem:[#allocation7 + $0x80] sm:$0xf]
        %v489 = vld [vmem:[#allocation7 + $0x84] sm:$0xf]
        %v490 = vld [vmem:[#allocation7 + $0x88] sm:$0xf]
        %v491 = vld [vmem:[#allocation7 + $0x8c] sm:$0xf]
        %v492 = vld [vmem:[#allocation7 + $0x90] sm:$0xf]
        %v493 = vld [vmem:[#allocation7 + $0x94] sm:$0xf]
        %v494 = vld [vmem:[#allocation7 + $0x98] sm:$0xf]
        %v495 = vld [vmem:[#allocation7 + $0x9c] sm:$0xf]
        %v496 = vld [vmem:[#allocation7 + $0xa0] sm:$0xf]
        %v497 = vld [vmem:[#allocation7 + $0xa4] sm:$0xf]
        %v498 = vld [vmem:[#allocation7 + $0xa8] sm:$0xf]
        %v499 = vld [vmem:[#allocation7 + $0xac] sm:$0xf]
        %v500 = vld [vmem:[#allocation7 + $0xb0] sm:$0xf]
        %v501 = vld [vmem:[#allocation7 + $0xb4] sm:$0xf]
        %v502 = vld [vmem:[#allocation7 + $0xb8] sm:$0xf]
        %v503 = vld [vmem:[#allocation7 + $0xbc] sm:$0xf]
        %v504 = vld [vmem:[#allocation7 + $0xc0] sm:$0xf]
        %v505 = vld [vmem:[#allocation7 + $0xc4] sm:$0xf]
        %v506 = vld [vmem:[#allocation7 + $0xc8] sm:$0xf]
        %v507 = vld [vmem:[#allocation7 + $0xcc] sm:$0xf]
        %v508 = vld [vmem:[#allocation7 + $0xd0] sm:$0xf]
        %v509 = vld [vmem:[#allocation7 + $0xd4] sm:$0xf]
        %v510 = vld [vmem:[#allocation7 + $0xd8] sm:$0xf]
        %v511 = vld [vmem:[#allocation7 + $0xdc] sm:$0xf]
        %v512 = vld [vmem:[#allocation7 + $0xe0] sm:$0xf]
        %v513 = vld [vmem:[#allocation7 + $0xe4] sm:$0xf]
        %v514 = vld [vmem:[#allocation7 + $0xe8] sm:$0xf]
        %v515 = vld [vmem:[#allocation7 + $0xec] sm:$0xf]
        %v516 = vld [vmem:[#allocation7 + $0xf0] sm:$0xf]
        %v517 = vld [vmem:[#allocation7 + $0xf4] sm:$0xf]
        %v518 = vld [vmem:[#allocation7 + $0xf8] sm:$0xf]
        %v519 = vld [vmem:[#allocation7 + $0xfc] sm:$0xf]
        %v584 = vunpack.c.l.b16 %v456
        %v585 = vunpack.c.l.b16 %v457
        %v586 = vunpack.c.l.b16 %v458
        %v587 = vunpack.c.l.b16 %v459
        %v588 = vunpack.c.l.b16 %v460
        %v589 = vunpack.c.l.b16 %v461
        %v590 = vunpack.c.l.b16 %v462
        %v591 = vunpack.c.l.b16 %v463
        %v592 = vunpack.c.l.b16 %v464
        %v593 = vunpack.c.l.b16 %v465
        %v594 = vunpack.c.l.b16 %v466
        %v595 = vunpack.c.l.b16 %v467
        %v596 = vunpack.c.l.b16 %v468
        %v597 = vunpack.c.l.b16 %v469
        %v598 = vunpack.c.l.b16 %v470
        %v599 = vunpack.c.l.b16 %v471
        %v600 = vunpack.c.l.b16 %v472
        %v601 = vunpack.c.l.b16 %v473
        %v602 = vunpack.c.l.b16 %v474
        %v603 = vunpack.c.l.b16 %v475
        %v604 = vunpack.c.l.b16 %v476
        %v605 = vunpack.c.l.b16 %v477
        %v606 = vunpack.c.l.b16 %v478
        %v607 = vunpack.c.l.b16 %v479
        %v608 = vunpack.c.l.b16 %v480
        %v609 = vunpack.c.l.b16 %v481
        %v610 = vunpack.c.l.b16 %v482
        %v611 = vunpack.c.l.b16 %v483
        %v612 = vunpack.c.l.b16 %v484
        %v613 = vunpack.c.l.b16 %v485
        %v614 = vunpack.c.l.b16 %v486
        %v615 = vunpack.c.l.b16 %v487
        %v616 = vunpack.c.l.b16 %v488
        %v617 = vunpack.c.l.b16 %v489
        %v618 = vunpack.c.l.b16 %v490
        %v619 = vunpack.c.l.b16 %v491
        %v620 = vunpack.c.l.b16 %v492
        %v621 = vunpack.c.l.b16 %v493
        %v622 = vunpack.c.l.b16 %v494
        %v623 = vunpack.c.l.b16 %v495
        %v624 = vunpack.c.l.b16 %v496
        %v625 = vunpack.c.l.b16 %v497
        %v626 = vunpack.c.l.b16 %v498
        %v627 = vunpack.c.l.b16 %v499
        %v628 = vunpack.c.l.b16 %v500
        %v629 = vunpack.c.l.b16 %v501
        %v630 = vunpack.c.l.b16 %v502
        %v631 = vunpack.c.l.b16 %v503
        %v632 = vunpack.c.l.b16 %v504
        %v633 = vunpack.c.l.b16 %v505
        %v634 = vunpack.c.l.b16 %v506
        %v635 = vunpack.c.l.b16 %v507
        %v636 = vunpack.c.l.b16 %v508
        %v637 = vunpack.c.l.b16 %v509
        %v638 = vunpack.c.l.b16 %v510
        %v639 = vunpack.c.l.b16 %v511
        %v640 = vunpack.c.l.b16 %v512
        %v641 = vunpack.c.l.b16 %v513
        %v642 = vunpack.c.l.b16 %v514
        %v643 = vunpack.c.l.b16 %v515
        %v644 = vunpack.c.l.b16 %v516
        %v645 = vunpack.c.l.b16 %v517
        %v646 = vunpack.c.l.b16 %v518
        %v647 = vunpack.c.l.b16 %v519
        %v648 = vpack.c.b16 %v585, %v584
        %v649 = vpack.c.b16 %v587, %v586
        %v650 = vpack.c.b16 %v589, %v588
        %v651 = vpack.c.b16 %v591, %v590
        %v652 = vpack.c.b16 %v593, %v592
        %v653 = vpack.c.b16 %v595, %v594
        %v654 = vpack.c.b16 %v597, %v596
        %v655 = vpack.c.b16 %v599, %v598
        %v656 = vpack.c.b16 %v601, %v600
        %v657 = vpack.c.b16 %v603, %v602
        %v658 = vpack.c.b16 %v605, %v604
        %v659 = vpack.c.b16 %v607, %v606
        %v660 = vpack.c.b16 %v609, %v608
        %v661 = vpack.c.b16 %v611, %v610
        %v662 = vpack.c.b16 %v613, %v612
        %v663 = vpack.c.b16 %v615, %v614
        %v664 = vpack.c.b16 %v617, %v616
        %v665 = vpack.c.b16 %v619, %v618
        %v666 = vpack.c.b16 %v621, %v620
        %v667 = vpack.c.b16 %v623, %v622
        %v668 = vpack.c.b16 %v625, %v624
        %v669 = vpack.c.b16 %v627, %v626
        %v670 = vpack.c.b16 %v629, %v628
        %v671 = vpack.c.b16 %v631, %v630
        %v672 = vpack.c.b16 %v633, %v632
        %v673 = vpack.c.b16 %v635, %v634
        %v674 = vpack.c.b16 %v637, %v636
        %v675 = vpack.c.b16 %v639, %v638
        %v676 = vpack.c.b16 %v641, %v640
        %v677 = vpack.c.b16 %v643, %v642
        %v678 = vpack.c.b16 %v645, %v644
        %v679 = vpack.c.b16 %v647, %v646
        %712 = vmatprep.subr.bf16.mxu0 0
        %713 = vmatpush1.bf16.msra.mxu0 %v648
        %714 = vmatprep.subr.bf16.mxu0 0
        %715 = vmatpush1.bf16.msra.mxu0 %v649
        %716 = vmatprep.subr.bf16.mxu0 0
        %717 = vmatpush1.bf16.msra.mxu0 %v650
        %718 = vmatprep.subr.bf16.mxu0 0
        %719 = vmatpush1.bf16.msra.mxu0 %v651
        %720 = vmatprep.subr.bf16.mxu0 0
        %721 = vmatpush1.bf16.msra.mxu0 %v652
        %722 = vmatprep.subr.bf16.mxu0 0
        %723 = vmatpush1.bf16.msra.mxu0 %v653
        %724 = vmatprep.subr.bf16.mxu0 0
        %725 = vmatpush1.bf16.msra.mxu0 %v654
        %726 = vmatprep.subr.bf16.mxu0 0
        %727 = vmatpush1.bf16.msra.mxu0 %v655
        %728 = vmatprep.subr.bf16.mxu0 0
        %729 = vmatpush1.bf16.msra.mxu0 %v656
        %730 = vmatprep.subr.bf16.mxu0 0
        %731 = vmatpush1.bf16.msra.mxu0 %v657
        %732 = vmatprep.subr.bf16.mxu0 0
        %733 = vmatpush1.bf16.msra.mxu0 %v658
        %734 = vmatprep.subr.bf16.mxu0 0
        %735 = vmatpush1.bf16.msra.mxu0 %v659
        %736 = vmatprep.subr.bf16.mxu0 0
        %737 = vmatpush1.bf16.msra.mxu0 %v660
        %738 = vmatprep.subr.bf16.mxu0 0
        %739 = vmatpush1.bf16.msra.mxu0 %v661
        %740 = vmatprep.subr.bf16.mxu0 0
        %741 = vmatpush1.bf16.msra.mxu0 %v662
        %742 = vmatprep.subr.bf16.mxu0 0
        %743 = vmatpush1.bf16.msra.mxu0 %v663
        %744 = vmatprep.mubr.bf16.mxu0 %v453
        %745 = vmatmul.mubr.bf16.gmra.mrb[0].mxu0 %v452
        %v746 = vpop.f32.mrb[0].mxu0
        %v747 = vadd.f32 0.0, %v746
        %v748 = vpop.f32.mrb[0].mxu0
        %v749 = vpop.f32.mrb[0].mxu0
        %v750 = vpop.f32.mrb[0].mxu0
        %751 = vdwg.mxu0
        %752 = vmatprep.subr.bf16.mxu0 0
        %753 = vmatpush1.bf16.msra.mxu0 %v664
        %754 = vmatprep.subr.bf16.mxu0 0
        %755 = vmatpush1.bf16.msra.mxu0 %v665
        %756 = vmatprep.subr.bf16.mxu0 0
        %757 = vmatpush1.bf16.msra.mxu0 %v666
        %758 = vmatprep.subr.bf16.mxu0 0
        %759 = vmatpush1.bf16.msra.mxu0 %v667
        %760 = vmatprep.subr.bf16.mxu0 0
        %761 = vmatpush1.bf16.msra.mxu0 %v668
        %762 = vmatprep.subr.bf16.mxu0 0
        %763 = vmatpush1.bf16.msra.mxu0 %v669
        %764 = vmatprep.subr.bf16.mxu0 0
        %765 = vmatpush1.bf16.msra.mxu0 %v670
        %766 = vmatprep.subr.bf16.mxu0 0
        %767 = vmatpush1.bf16.msra.mxu0 %v671
        %768 = vmatprep.subr.bf16.mxu0 0
        %769 = vmatpush1.bf16.msra.mxu0 %v672
        %770 = vmatprep.subr.bf16.mxu0 0
        %771 = vmatpush1.bf16.msra.mxu0 %v673
        %772 = vmatprep.subr.bf16.mxu0 0
        %773 = vmatpush1.bf16.msra.mxu0 %v674
        %774 = vmatprep.subr.bf16.mxu0 0
        %775 = vmatpush1.bf16.msra.mxu0 %v675
        %776 = vmatprep.subr.bf16.mxu0 0
        %777 = vmatpush1.bf16.msra.mxu0 %v676
        %778 = vmatprep.subr.bf16.mxu0 0
        %779 = vmatpush1.bf16.msra.mxu0 %v677
        %780 = vmatprep.subr.bf16.mxu0 0
        %781 = vmatpush1.bf16.msra.mxu0 %v678
        %782 = vmatprep.subr.bf16.mxu0 0
        %783 = vmatpush1.bf16.msra.mxu0 %v679
        %784 = vmatprep.mubr.bf16.mxu0 %v455
        %785 = vmatmul.mubr.bf16.gmra.mrb[0].mxu0 %v454
        %v786 = vpop.f32.mrb[0].mxu0
        %v787 = vadd.f32 %v747, %v786
        %v788 = vpop.f32.mrb[0].mxu0
        %v789 = vpop.f32.mrb[0].mxu0
        %v790 = vpop.f32.mrb[0].mxu0
        %791 = vdwg.mxu0
        %v792 = vmul.f32 %v787, %v447
        %v793 = vld [vmem:[%s4] sm:$0x1]
        %v795 = vlaneseq
        %v796 = vshrl.u32 %v795, 7
        %v797 = vsub.s32 0, %v796
        %v798 = vrot.slane %v793, %v797
        %v800 = vadd.f32 %v792, %v798
        %801 = vst [vmem:[%s268] sm:$0xff] %v800
        %s802 = sand.u32 %s141, 1
        %s803 = scalar_lea.sflag [#allocation4], %s802
        %s804 = sand.u32 %s141, 1
        %s805 = smul.addr %s804, 8
        %s806 = scalar_lea.vmem [#allocation8], %s805
        // Predicated region
        $region53: #{tpu_custom_call.1} parent=39 // pred_check
          %p807 = pneg %p151
        $region54: #{tpu_custom_call.1} parent=39 // pred_check_branch
          %809 = sbr.rel (%p807) target = $region56
        $region55: #{tpu_custom_call.1} parent=39 // pred_region
          %s811 = ssub.s32 128, 128
          %812 = vsyncadd %s803, %s811
          %s813 = smul.addr %s23, 128
          %s814 = scalar_lea.hbm %s5, %s813
          %s816 = sshll.u32 %s806, 4
          %s817 = int_to_ptr.vmem [resolvable:$true] %s816
          %819 = dma.vmem_to_hbm [thread:$0]  %s817, 128, %s814, %s803
        $region56: #{tpu_custom_call.1} parent=39 // pred_fallthru
          _
      $region40: #{tpu_custom_call.1} parent=5 // pred_fallthru
        _
      %p820 = scmp.le.s32.totalorder 2, %s18
      // Predicated region
      $region57: #{tpu_custom_call.1} parent=5 // pred_check
        %p821 = pneg %p820
      $region58: #{tpu_custom_call.1} parent=5 // pred_check_branch
        %823 = sbr.rel (%p821) target = $region60
      $region59: #{tpu_custom_call.1} parent=5 // pred_region
        %s824 = ssub.s32 %s18, 2
        // Predicated region
        $region61: #{tpu_custom_call.1} parent=59 // pred_check
          %p825 = pneg %p157
        $region62: #{tpu_custom_call.1} parent=59 // pred_check_branch
          %827 = sbr.rel (%p825) target = $region64
        $region63: #{tpu_custom_call.1} parent=59 // pred_region
          %s828 = sand.u32 %s142, 1
          %s829 = scalar_lea.sflag [#allocation4], %s828
          %s830 = sand.u32 %s142, 1
          %s831 = smul.addr %s830, 8
          %s832 = scalar_lea.vmem [#allocation8], %s831
          %833 = dma.done %s829, 128
        $region64: #{tpu_custom_call.1} parent=59 // pred_fallthru
          _
      $region60: #{tpu_custom_call.1} parent=5 // pred_fallthru
        _
    $region6: #{tpu_custom_call.1} parent=1 // loop_footer
      %s22 = sadd.s32 1, %s18
    $region7: #{tpu_custom_call.1} parent=1 // loop_footer_branch
      %17 = sbr.rel target = $region3
    $region8: #{tpu_custom_call.1} parent=1 // loop_exit
      _
    %834 = vsyncpa [#allocation3], 1
    %s835 = scalar_lea.sflag [#allocation3], 1
    %836 = vsyncpa %s835, 1
    %837 = vsyncpa [#allocation6], 1
    %838 = vsyncpa [#allocation4], 1
    %s839 = scalar_lea.sflag [#allocation4], 1
    %840 = vsyncpa %s839, 1

</llo_original>
